<compile_context>
chip_gen: v6e
topology: v6e:2x2x1
jax: 0.10.0
libtpu: 0.0.40
codegen_flags: <defaults>
</compile_context>

<pallas_src>
import functools

import jax
import jax.numpy as jnp
from jax import lax
from jax.experimental import pallas as pl
from jax.experimental.pallas import tpu as pltpu


def _vmem_capacity_bytes(default=64 * 1024 * 1024):
    """Per-TensorCore VMEM capacity; conservative default if the query fails."""
    try:
        info = pltpu.get_tpu_info()
        cap = getattr(info, "vmem_capacity_bytes", None)
        if cap:
            return int(cap)
    except Exception:
        pass
    return default


def _pick_row_tile(n, max_rows=256):
    """Query-row tile: full N when small, else a multiple of 128 dividing N."""
    if n <= max_rows:
        return n
    for cand in range(max_rows - (max_rows % 128), 0, -128):
        if n % cand == 0:
            return cand
    return n


def _pick_batch_block(batch, n, c, rows, out, budget_bytes, need_two_steps):
    """Largest divisor of batch whose per-step working set fits the budget.

    When the row grid has a single step, cap at batch//2 so the grid always has
    >= 2 steps and the "parallel" axis can shard across v7x's two TensorCores.
    """
    per_b = (2 * n * c * 4            # x block (double-buffered)
             + 5 * rows * n * 4       # dist / masked d / compares / temporaries
             + rows * n * 2           # one-hot sel in bf16 for the gather matmul
             + 6 * rows * out * 4     # a3 / bj / h / m / running max (+ slack)
             + 2 * out * rows * 4)    # output block (double-buffered)
    cap = batch
    if need_two_steps and batch >= 2:
        cap = batch // 2
    cap = max(1, min(cap, 8))
    best = 1
    for cand in range(1, cap + 1):
        if batch % cand == 0 and cand * per_b <= budget_bytes:
            best = cand
    return best


def dyn_edgeconv_kernel(x_ref, w1d_ref, w1b_ref, b1_ref, w2_ref, b2_ref, o_ref, *, k):
    """One (batch block, query-row tile) per grid step: kNN + edge-MLP + max."""
    bb, n, c = x_ref.shape
    out = o_ref.shape[1]
    rows = o_ref.shape[2]

    xk = x_ref[...].astype(jnp.float32)                        # [Bb, N, C] keys
    if rows == n:
        xq = xk                                                # untiled rows
    else:
        row0 = pl.multiple_of(pl.program_id(1) * rows, rows)
        xq = x_ref[:, pl.ds(row0, rows), :].astype(jnp.float32)  # [Bb, rows, C]

    xk16 = xk.astype(jnp.bfloat16)
    xq16 = xq.astype(jnp.bfloat16)

    w1d = w1d_ref[...].astype(jnp.bfloat16)                    # (W1a - W1b) [C, OUT]
    w1b = w1b_ref[...].astype(jnp.bfloat16)                    # W1b         [C, OUT]
    w2 = w2_ref[...].astype(jnp.bfloat16)                      # [OUT, OUT]
    b1 = b1_ref[...]                                           # [1, OUT] f32
    b2 = b2_ref[...]                                           # [1, OUT] f32

    # ---- layer-1 "self" term for the query rows: A = x_i @ (W1a - W1b) ------
    a3 = jnp.dot(xq16.reshape(bb * rows, c), w1d,
                 preferred_element_type=jnp.float32).reshape(bb, rows, out)

    # ---- pairwise squared distances (query rows vs all keys, f32) -----------
    gram = jnp.einsum("brc,bmc->brm", xq, xk,
                      preferred_element_type=jnp.float32)      # [Bb, rows, N]
    sqk = jnp.sum(xk * xk, axis=-1)                            # [Bb, N]
    sqq = jnp.sum(xq * xq, axis=-1)                            # [Bb, rows]
    dist = sqq[:, :, None] + sqk[:, None, :] - 2.0 * gram      # [Bb, rows, N]

    # broadcast column-index iota (no [Bb, rows, N] materialization)
    col = lax.broadcasted_iota(jnp.int32, (1, 1, n), 2)

    # ---- k nearest neighbors with fused edge-MLP + running-max aggregation --
    # TODO(synk): pack (distance, index) into one reduction key so a single
    # cross-lane reduce per k-step suffices (kNN becomes XLU-bound at large N).
    d = dist
    m_acc = None
    for step in range(k):                                      # k small & static
        mn = jnp.min(d, axis=-1, keepdims=True)
        first = jnp.min(jnp.where(d <= mn, col, n), axis=-1, keepdims=True)
        sel = col == first                                     # one-hot argmin
        d = jnp.where(sel, jnp.float32(jnp.inf), d)

        # exact one-hot gather of the neighbor's bf16 features (bf16 MXU, f32 acc)
        xj = jnp.einsum("brm,bmc->brc", sel.astype(jnp.bfloat16), xk16,
                        preferred_element_type=jnp.float32)    # [Bb, rows, C]
        bj = jnp.dot(xj.astype(jnp.bfloat16).reshape(bb * rows, c), w1b,
                     preferred_element_type=jnp.float32).reshape(bb, rows, out)

        h = jnp.maximum(a3 + bj + b1, 0.0)                     # layer 1 + ReLU
        m = jnp.dot(h.astype(jnp.bfloat16).reshape(bb * rows, out), w2,
                    preferred_element_type=jnp.float32).reshape(bb, rows, out)
        m = jnp.maximum(m + b2, 0.0)                           # layer 2 + ReLU
        m_acc = m if m_acc is None else jnp.maximum(m_acc, m)  # max aggregation

    # lane-dense store: [Bb, OUT, rows] (transpose rides the XLU slot)
    o_ref[...] = jnp.swapaxes(m_acc, 1, 2).astype(o_ref.dtype)


def dynamic_edge_conv(x_bcn1, w1, b1, w2, b2, k):
    """x_bcn1: [B, C, N, 1] -> [B, OUT, N, 1] (PyTorch module convention)."""
    B, C, N, _ = x_bcn1.shape
    OUT = w2.shape[-1]
    x = jnp.transpose(x_bcn1[..., 0], (0, 2, 1)).astype(jnp.float32)   # [B, N, C]

    # split layer-1 weights: MLP1(cat(xi, xj-xi)) == xi@(W1a-W1b) + xj@W1b + b1
    w1_diff = (w1[:C] - w1[C:]).astype(jnp.float32)            # [C, OUT]
    w1_b = w1[C:].astype(jnp.float32)                          # [C, OUT]
    b1_f = b1.astype(jnp.float32).reshape(1, OUT)
    w2_f = w2.astype(jnp.float32)
    b2_f = b2.astype(jnp.float32).reshape(1, OUT)

    # generation-aware VMEM sizing (v7x: 64 MiB cap -> ~56 MiB limit; v5e/v6e: ~112 MiB)
    vmem_cap = _vmem_capacity_bytes()
    vmem_limit = min(int(vmem_cap * 7 // 8), 128 * 1024 * 1024)
    budget = int(vmem_limit * 0.7)

    row_tile = _pick_row_tile(N)
    row_grid = N // row_tile
    b_blk = _pick_batch_block(B, N, C, row_tile, OUT, budget,
                              need_two_steps=(row_grid == 1))
    grid = (B // b_blk, row_grid)

    flops = B * (2 * N * N * C                 # pairwise gram
                 + 2 * N * C * OUT             # layer-1 self term
                 + 2 * k * N * N * C           # one-hot bf16 neighbor gathers
                 + 2 * k * N * C * OUT         # neighbor term @ W1b
                 + 2 * k * N * OUT * OUT)      # layer-2
    bytes_accessed = 4 * (x.size + B * N * OUT
                          + w1_diff.size + w1_b.size + b1_f.size
                          + w2_f.size + b2_f.size)

    out = pl.pallas_call(
        functools.partial(dyn_edgeconv_kernel, k=k),
        out_shape=jax.ShapeDtypeStruct((B, OUT, N), jnp.float32),
        grid_spec=pltpu.PrefetchScalarGridSpec(
            num_scalar_prefetch=0,
            grid=grid,
            in_specs=[
                pl.BlockSpec((b_blk, N, C), lambda b, r: (b, 0, 0)),   # keys (resident over r)
                pl.BlockSpec((C, OUT), lambda b, r: (0, 0)),
                pl.BlockSpec((C, OUT), lambda b, r: (0, 0)),
                pl.BlockSpec((1, OUT), lambda b, r: (0, 0)),
                pl.BlockSpec((OUT, OUT), lambda b, r: (0, 0)),
                pl.BlockSpec((1, OUT), lambda b, r: (0, 0)),
            ],
            out_specs=pl.BlockSpec((b_blk, OUT, row_tile), lambda b, r: (b, 0, r)),
        ),
        compiler_params=pltpu.CompilerParams(
            dimension_semantics=("parallel", "parallel"),
            vmem_limit_bytes=vmem_limit,
        ),
        cost_estimate=pl.CostEstimate(
            flops=int(flops), transcendentals=0, bytes_accessed=int(bytes_accessed)),
    )(x, w1_diff, w1_b, b1_f, w2_f, b2_f)

    return out[..., None]                                      # [B, OUT, N, 1]


def reference(x_bcn1, w1, b1, w2, b2, k):
    """Pure-JAX f32 reference (gather-based) for correctness checking."""
    B, C, N, _ = x_bcn1.shape
    x = jnp.transpose(x_bcn1[..., 0], (0, 2, 1))               # [B, N, C]

    def per_batch(xb):
        d = jnp.sum((xb[:, None, :] - xb[None, :, :]) ** 2, axis=-1)
        _, idx = lax.top_k(-d, k)                              # [N, k]
        xj = xb[idx]                                           # [N, k, C]
        xi = jnp.broadcast_to(xb[:, None, :], (N, k, C))
        feat = jnp.concatenate([xi, xj - xi], axis=-1)
        h = jnp.maximum(feat @ w1 + b1[0], 0.0)
        h = jnp.maximum(h @ w2 + b2[0], 0.0)
        return jnp.max(h, axis=1)                              # [N, OUT]

    out = jax.vmap(per_batch)(x)
    return jnp.transpose(out, (0, 2, 1))[..., None]


if __name__ == "__main__":
    B, C, N = 2, 4, 16
    OUT = 32
    K = 4

    key = jax.random.PRNGKey(0)
    kx, k1, k2, k3, k4 = jax.random.split(key, 5)

    # deterministic synthetic parameters (PyTorch Linear(2C->OUT), Linear(OUT->OUT))
    x = jax.random.normal(kx, (B, C, N, 1), dtype=jnp.float32)
    w1 = jax.random.normal(k1, (2 * C, OUT), dtype=jnp.float32) * 0.1
    b1 = jax.random.normal(k2, (1, OUT), dtype=jnp.float32) * 0.1
    w2 = jax.random.normal(k3, (OUT, OUT), dtype=jnp.float32) * 0.1
    b2 = jax.random.normal(k4, (1, OUT), dtype=jnp.float32) * 0.1

    out = jax.block_until_ready(dynamic_edge_conv(x, w1, b1, w2, b2, K))
    ref = jax.block_until_ready(reference(x, w1, b1, w2, b2, K))

    assert out.shape == (B, OUT, N, 1), out.shape
    # kernel uses bf16 MXU operands for the MLP matmuls -> relaxed tolerance
    # against the pure-f32 reference (kNN selection itself stays f32-exact).
    max_err = float(jnp.max(jnp.abs(out - ref)))
    assert jnp.allclose(out, ref, atol=3e-2, rtol=3e-2), f"mismatch vs reference: {max_err}"

    print("KERNEL_OK")
</pallas_src>

<mosaic_0001>
module attributes {stable_mosaic.version = 11 : i64} {
  func.func @dyn_edgeconv_kernel(%arg0: i32, %arg1: i32, %arg2: memref<1x16x4xf32, #tpu.memory_space<vmem>>, %arg3: memref<4x32xf32, #tpu.memory_space<vmem>>, %arg4: memref<4x32xf32, #tpu.memory_space<vmem>>, %arg5: memref<1x32xf32, #tpu.memory_space<vmem>>, %arg6: memref<32x32xf32, #tpu.memory_space<vmem>>, %arg7: memref<1x32xf32, #tpu.memory_space<vmem>>, %arg8: memref<1x32x16xf32, #tpu.memory_space<vmem>>) attributes {dimension_semantics = [#tpu.dimension_semantics<parallel>, #tpu.dimension_semantics<parallel>], iteration_bounds = array<i64: 2, 1>, scalar_prefetch = 0 : i64, scratch_operands = 0 : i64, tpu.core_type = #tpu.core_type<tc>, window_params = [{transform_indices = @transform_0, window_bounds = array<i64: 1, 16, 4>}, {pipeline_mode = #tpu.pipeline_mode<synchronous>, transform_indices = @transform_1, window_bounds = array<i64: 4, 32>}, {pipeline_mode = #tpu.pipeline_mode<synchronous>, transform_indices = @transform_2, window_bounds = array<i64: 4, 32>}, {pipeline_mode = #tpu.pipeline_mode<synchronous>, transform_indices = @transform_3, window_bounds = array<i64: 1, 32>}, {pipeline_mode = #tpu.pipeline_mode<synchronous>, transform_indices = @transform_4, window_bounds = array<i64: 32, 32>}, {pipeline_mode = #tpu.pipeline_mode<synchronous>, transform_indices = @transform_5, window_bounds = array<i64: 1, 32>}, {transform_indices = @transform_6, window_bounds = array<i64: 1, 32, 16>}]} {
    %c0 = arith.constant 0 : index
    %c0_0 = arith.constant 0 : index
    %c0_1 = arith.constant 0 : index
    %0 = vector.load %arg2[%c0, %c0_0, %c0_1] : memref<1x16x4xf32, #tpu.memory_space<vmem>>, vector<1x16x4xf32>
    %1 = arith.truncf %0 : vector<1x16x4xf32> to vector<1x16x4xbf16>
    %2 = arith.truncf %0 : vector<1x16x4xf32> to vector<1x16x4xbf16>
    %c0_2 = arith.constant 0 : index
    %c0_3 = arith.constant 0 : index
    %3 = vector.load %arg3[%c0_2, %c0_3] : memref<4x32xf32, #tpu.memory_space<vmem>>, vector<4x32xf32>
    %4 = arith.truncf %3 : vector<4x32xf32> to vector<4x32xbf16>
    %c0_4 = arith.constant 0 : index
    %c0_5 = arith.constant 0 : index
    %5 = vector.load %arg4[%c0_4, %c0_5] : memref<4x32xf32, #tpu.memory_space<vmem>>, vector<4x32xf32>
    %6 = arith.truncf %5 : vector<4x32xf32> to vector<4x32xbf16>
    %c0_6 = arith.constant 0 : index
    %c0_7 = arith.constant 0 : index
    %7 = vector.load %arg6[%c0_6, %c0_7] : memref<32x32xf32, #tpu.memory_space<vmem>>, vector<32x32xf32>
    %8 = arith.truncf %7 : vector<32x32xf32> to vector<32x32xbf16>
    %c0_8 = arith.constant 0 : index
    %c0_9 = arith.constant 0 : index
    %9 = vector.load %arg5[%c0_8, %c0_9] : memref<1x32xf32, #tpu.memory_space<vmem>>, vector<1x32xf32>
    %c0_10 = arith.constant 0 : index
    %c0_11 = arith.constant 0 : index
    %10 = vector.load %arg7[%c0_10, %c0_11] : memref<1x32xf32, #tpu.memory_space<vmem>>, vector<1x32xf32>
    %11 = vector.shape_cast %2 : vector<1x16x4xbf16> to vector<16x4xbf16>
    %cst = arith.constant dense<0.000000e+00> : vector<16x32xf32>
    %12 = tpu.matmul %11, %4, %cst {dimension_numbers = #tpu.dot_dimension_numbers<[1], [0], [0], [1], [0, 0, 1, 1], [], []>} : vector<16x4xbf16>, vector<4x32xbf16>, vector<16x32xf32> -> vector<16x32xf32>
    %13 = vector.shape_cast %12 : vector<16x32xf32> to vector<1x16x32xf32>
    "tpu.trace_start"() <{level = 10 : i32, message = "brc,bmc->brm"}> : () -> ()
    %cst_12 = arith.constant dense<0.000000e+00> : vector<1x16x16xf32>
    %14 = tpu.matmul %0, %0, %cst_12 {dimension_numbers = #tpu.dot_dimension_numbers<[2], [2], [1], [1], [0, 0, 0, 1, 1, 1], [0], [0]>} : vector<1x16x4xf32>, vector<1x16x4xf32>, vector<1x16x16xf32> -> vector<1x16x16xf32>
    "tpu.trace_stop"() : () -> ()
    %15 = arith.mulf %0, %0 : vector<1x16x4xf32>
    %cst_13 = arith.constant dense<0.000000e+00> : vector<1x16xf32>
    %16 = vector.multi_reduction <add>, %15, %cst_13 [2] : vector<1x16x4xf32> to vector<1x16xf32>
    %17 = arith.mulf %0, %0 : vector<1x16x4xf32>
    %cst_14 = arith.constant dense<0.000000e+00> : vector<1x16xf32>
    %18 = vector.multi_reduction <add>, %17, %cst_14 [2] : vector<1x16x4xf32> to vector<1x16xf32>
    %19 = vector.shape_cast %18 : vector<1x16xf32> to vector<1x16x1xf32>
    %20 = vector.shape_cast %16 : vector<1x16xf32> to vector<1x1x16xf32>
    %21 = vector.broadcast %19 : vector<1x16x1xf32> to vector<1x16x16xf32>
    %22 = vector.broadcast %20 : vector<1x1x16xf32> to vector<1x16x16xf32>
    %23 = arith.addf %21, %22 : vector<1x16x16xf32>
    %cst_15 = arith.constant 2.000000e+00 : f32
    %24 = vector.broadcast %cst_15 : f32 to vector<1x16x16xf32>
    %25 = arith.mulf %24, %14 : vector<1x16x16xf32>
    %26 = arith.subf %23, %25 : vector<1x16x16xf32>
    %27 = tpu.iota {dimensions = array<i32: 2>} : vector<1x1x16xi32>
    %cst_16 = arith.constant dense<0x7F800000> : vector<1x16xf32>
    %28 = vector.multi_reduction <minimumf>, %26, %cst_16 [2] : vector<1x16x16xf32> to vector<1x16xf32>
    %29 = vector.shape_cast %28 : vector<1x16xf32> to vector<1x16x1xf32>
    %30 = vector.broadcast %29 : vector<1x16x1xf32> to vector<1x16x16xf32>
    %31 = arith.cmpf ole, %26, %30 : vector<1x16x16xf32>
    %c16_i32 = arith.constant 16 : i32
    %32 = vector.shape_cast %27 : vector<1x1x16xi32> to vector<1x1x16xi32>
    %33 = vector.broadcast %32 : vector<1x1x16xi32> to vector<1x16x16xi32>
    %34 = vector.broadcast %c16_i32 : i32 to vector<1x16x16xi32>
    %35 = arith.select %31, %33, %34 : vector<1x16x16xi1>, vector<1x16x16xi32>
    %cst_17 = arith.constant dense<2147483647> : vector<1x16xi32>
    %36 = vector.multi_reduction <minsi>, %35, %cst_17 [2] : vector<1x16x16xi32> to vector<1x16xi32>
    %37 = vector.shape_cast %36 : vector<1x16xi32> to vector<1x16x1xi32>
    %38 = vector.broadcast %27 : vector<1x1x16xi32> to vector<1x16x16xi32>
    %39 = vector.broadcast %37 : vector<1x16x1xi32> to vector<1x16x16xi32>
    %40 = arith.cmpi eq, %38, %39 : vector<1x16x16xi32>
    %cst_18 = arith.constant 0x7F800000 : f32
    %41 = vector.broadcast %cst_18 : f32 to vector<1x16x16xf32>
    %42 = arith.select %40, %41, %26 : vector<1x16x16xi1>, vector<1x16x16xf32>
    %43 = arith.extui %40 : vector<1x16x16xi1> to vector<1x16x16xi32>
    %44 = arith.sitofp %43 : vector<1x16x16xi32> to vector<1x16x16xf32>
    %45 = arith.truncf %44 : vector<1x16x16xf32> to vector<1x16x16xbf16>
    "tpu.trace_start"() <{level = 10 : i32, message = "brm,bmc->brc"}> : () -> ()
    %cst_19 = arith.constant dense<0.000000e+00> : vector<1x16x4xf32>
    %46 = tpu.matmul %45, %1, %cst_19 {dimension_numbers = #tpu.dot_dimension_numbers<[2], [1], [1], [2], [0, 0, 0, 1, 1, 2], [0], [0]>} : vector<1x16x16xbf16>, vector<1x16x4xbf16>, vector<1x16x4xf32> -> vector<1x16x4xf32>
    "tpu.trace_stop"() : () -> ()
    %47 = arith.truncf %46 : vector<1x16x4xf32> to vector<1x16x4xbf16>
    %48 = vector.shape_cast %47 : vector<1x16x4xbf16> to vector<16x4xbf16>
    %cst_20 = arith.constant dense<0.000000e+00> : vector<16x32xf32>
    %49 = tpu.matmul %48, %6, %cst_20 {dimension_numbers = #tpu.dot_dimension_numbers<[1], [0], [0], [1], [0, 0, 1, 1], [], []>} : vector<16x4xbf16>, vector<4x32xbf16>, vector<16x32xf32> -> vector<16x32xf32>
    %50 = vector.shape_cast %49 : vector<16x32xf32> to vector<1x16x32xf32>
    %51 = arith.addf %13, %50 : vector<1x16x32xf32>
    %52 = vector.shape_cast %9 : vector<1x32xf32> to vector<1x1x32xf32>
    %53 = vector.broadcast %52 : vector<1x1x32xf32> to vector<1x16x32xf32>
    %54 = arith.addf %51, %53 : vector<1x16x32xf32>
    %cst_21 = arith.constant 0.000000e+00 : f32
    %55 = vector.broadcast %cst_21 : f32 to vector<1x16x32xf32>
    %56 = arith.maximumf %54, %55 : vector<1x16x32xf32>
    %57 = arith.truncf %56 : vector<1x16x32xf32> to vector<1x16x32xbf16>
    %58 = vector.shape_cast %57 : vector<1x16x32xbf16> to vector<16x32xbf16>
    %cst_22 = arith.constant dense<0.000000e+00> : vector<16x32xf32>
    %59 = tpu.matmul %58, %8, %cst_22 {dimension_numbers = #tpu.dot_dimension_numbers<[1], [0], [0], [1], [0, 0, 1, 1], [], []>} : vector<16x32xbf16>, vector<32x32xbf16>, vector<16x32xf32> -> vector<16x32xf32>
    %60 = vector.shape_cast %59 : vector<16x32xf32> to vector<1x16x32xf32>
    %61 = vector.shape_cast %10 : vector<1x32xf32> to vector<1x1x32xf32>
    %62 = vector.broadcast %61 : vector<1x1x32xf32> to vector<1x16x32xf32>
    %63 = arith.addf %60, %62 : vector<1x16x32xf32>
    %cst_23 = arith.constant 0.000000e+00 : f32
    %64 = vector.broadcast %cst_23 : f32 to vector<1x16x32xf32>
    %65 = arith.maximumf %63, %64 : vector<1x16x32xf32>
    %cst_24 = arith.constant dense<0x7F800000> : vector<1x16xf32>
    %66 = vector.multi_reduction <minimumf>, %42, %cst_24 [2] : vector<1x16x16xf32> to vector<1x16xf32>
    %67 = vector.shape_cast %66 : vector<1x16xf32> to vector<1x16x1xf32>
    %68 = vector.broadcast %67 : vector<1x16x1xf32> to vector<1x16x16xf32>
    %69 = arith.cmpf ole, %42, %68 : vector<1x16x16xf32>
    %c16_i32_25 = arith.constant 16 : i32
    %70 = vector.shape_cast %27 : vector<1x1x16xi32> to vector<1x1x16xi32>
    %71 = vector.broadcast %70 : vector<1x1x16xi32> to vector<1x16x16xi32>
    %72 = vector.broadcast %c16_i32_25 : i32 to vector<1x16x16xi32>
    %73 = arith.select %69, %71, %72 : vector<1x16x16xi1>, vector<1x16x16xi32>
    %cst_26 = arith.constant dense<2147483647> : vector<1x16xi32>
    %74 = vector.multi_reduction <minsi>, %73, %cst_26 [2] : vector<1x16x16xi32> to vector<1x16xi32>
    %75 = vector.shape_cast %74 : vector<1x16xi32> to vector<1x16x1xi32>
    %76 = vector.broadcast %27 : vector<1x1x16xi32> to vector<1x16x16xi32>
    %77 = vector.broadcast %75 : vector<1x16x1xi32> to vector<1x16x16xi32>
    %78 = arith.cmpi eq, %76, %77 : vector<1x16x16xi32>
    %cst_27 = arith.constant 0x7F800000 : f32
    %79 = vector.broadcast %cst_27 : f32 to vector<1x16x16xf32>
    %80 = arith.select %78, %79, %42 : vector<1x16x16xi1>, vector<1x16x16xf32>
    %81 = arith.extui %78 : vector<1x16x16xi1> to vector<1x16x16xi32>
    %82 = arith.sitofp %81 : vector<1x16x16xi32> to vector<1x16x16xf32>
    %83 = arith.truncf %82 : vector<1x16x16xf32> to vector<1x16x16xbf16>
    "tpu.trace_start"() <{level = 10 : i32, message = "brm,bmc->brc"}> : () -> ()
    %cst_28 = arith.constant dense<0.000000e+00> : vector<1x16x4xf32>
    %84 = tpu.matmul %83, %1, %cst_28 {dimension_numbers = #tpu.dot_dimension_numbers<[2], [1], [1], [2], [0, 0, 0, 1, 1, 2], [0], [0]>} : vector<1x16x16xbf16>, vector<1x16x4xbf16>, vector<1x16x4xf32> -> vector<1x16x4xf32>
    "tpu.trace_stop"() : () -> ()
    %85 = arith.truncf %84 : vector<1x16x4xf32> to vector<1x16x4xbf16>
    %86 = vector.shape_cast %85 : vector<1x16x4xbf16> to vector<16x4xbf16>
    %cst_29 = arith.constant dense<0.000000e+00> : vector<16x32xf32>
    %87 = tpu.matmul %86, %6, %cst_29 {dimension_numbers = #tpu.dot_dimension_numbers<[1], [0], [0], [1], [0, 0, 1, 1], [], []>} : vector<16x4xbf16>, vector<4x32xbf16>, vector<16x32xf32> -> vector<16x32xf32>
    %88 = vector.shape_cast %87 : vector<16x32xf32> to vector<1x16x32xf32>
    %89 = arith.addf %13, %88 : vector<1x16x32xf32>
    %90 = vector.shape_cast %9 : vector<1x32xf32> to vector<1x1x32xf32>
    %91 = vector.broadcast %90 : vector<1x1x32xf32> to vector<1x16x32xf32>
    %92 = arith.addf %89, %91 : vector<1x16x32xf32>
    %cst_30 = arith.constant 0.000000e+00 : f32
    %93 = vector.broadcast %cst_30 : f32 to vector<1x16x32xf32>
    %94 = arith.maximumf %92, %93 : vector<1x16x32xf32>
    %95 = arith.truncf %94 : vector<1x16x32xf32> to vector<1x16x32xbf16>
    %96 = vector.shape_cast %95 : vector<1x16x32xbf16> to vector<16x32xbf16>
    %cst_31 = arith.constant dense<0.000000e+00> : vector<16x32xf32>
    %97 = tpu.matmul %96, %8, %cst_31 {dimension_numbers = #tpu.dot_dimension_numbers<[1], [0], [0], [1], [0, 0, 1, 1], [], []>} : vector<16x32xbf16>, vector<32x32xbf16>, vector<16x32xf32> -> vector<16x32xf32>
    %98 = vector.shape_cast %97 : vector<16x32xf32> to vector<1x16x32xf32>
    %99 = vector.shape_cast %10 : vector<1x32xf32> to vector<1x1x32xf32>
    %100 = vector.broadcast %99 : vector<1x1x32xf32> to vector<1x16x32xf32>
    %101 = arith.addf %98, %100 : vector<1x16x32xf32>
    %cst_32 = arith.constant 0.000000e+00 : f32
    %102 = vector.broadcast %cst_32 : f32 to vector<1x16x32xf32>
    %103 = arith.maximumf %101, %102 : vector<1x16x32xf32>
    %104 = arith.maximumf %65, %103 : vector<1x16x32xf32>
    %cst_33 = arith.constant dense<0x7F800000> : vector<1x16xf32>
    %105 = vector.multi_reduction <minimumf>, %80, %cst_33 [2] : vector<1x16x16xf32> to vector<1x16xf32>
    %106 = vector.shape_cast %105 : vector<1x16xf32> to vector<1x16x1xf32>
    %107 = vector.broadcast %106 : vector<1x16x1xf32> to vector<1x16x16xf32>
    %108 = arith.cmpf ole, %80, %107 : vector<1x16x16xf32>
    %c16_i32_34 = arith.constant 16 : i32
    %109 = vector.shape_cast %27 : vector<1x1x16xi32> to vector<1x1x16xi32>
    %110 = vector.broadcast %109 : vector<1x1x16xi32> to vector<1x16x16xi32>
    %111 = vector.broadcast %c16_i32_34 : i32 to vector<1x16x16xi32>
    %112 = arith.select %108, %110, %111 : vector<1x16x16xi1>, vector<1x16x16xi32>
    %cst_35 = arith.constant dense<2147483647> : vector<1x16xi32>
    %113 = vector.multi_reduction <minsi>, %112, %cst_35 [2] : vector<1x16x16xi32> to vector<1x16xi32>
    %114 = vector.shape_cast %113 : vector<1x16xi32> to vector<1x16x1xi32>
    %115 = vector.broadcast %27 : vector<1x1x16xi32> to vector<1x16x16xi32>
    %116 = vector.broadcast %114 : vector<1x16x1xi32> to vector<1x16x16xi32>
    %117 = arith.cmpi eq, %115, %116 : vector<1x16x16xi32>
    %cst_36 = arith.constant 0x7F800000 : f32
    %118 = vector.broadcast %cst_36 : f32 to vector<1x16x16xf32>
    %119 = arith.select %117, %118, %80 : vector<1x16x16xi1>, vector<1x16x16xf32>
    %120 = arith.extui %117 : vector<1x16x16xi1> to vector<1x16x16xi32>
    %121 = arith.sitofp %120 : vector<1x16x16xi32> to vector<1x16x16xf32>
    %122 = arith.truncf %121 : vector<1x16x16xf32> to vector<1x16x16xbf16>
    "tpu.trace_start"() <{level = 10 : i32, message = "brm,bmc->brc"}> : () -> ()
    %cst_37 = arith.constant dense<0.000000e+00> : vector<1x16x4xf32>
    %123 = tpu.matmul %122, %1, %cst_37 {dimension_numbers = #tpu.dot_dimension_numbers<[2], [1], [1], [2], [0, 0, 0, 1, 1, 2], [0], [0]>} : vector<1x16x16xbf16>, vector<1x16x4xbf16>, vector<1x16x4xf32> -> vector<1x16x4xf32>
    "tpu.trace_stop"() : () -> ()
    %124 = arith.truncf %123 : vector<1x16x4xf32> to vector<1x16x4xbf16>
    %125 = vector.shape_cast %124 : vector<1x16x4xbf16> to vector<16x4xbf16>
    %cst_38 = arith.constant dense<0.000000e+00> : vector<16x32xf32>
    %126 = tpu.matmul %125, %6, %cst_38 {dimension_numbers = #tpu.dot_dimension_numbers<[1], [0], [0], [1], [0, 0, 1, 1], [], []>} : vector<16x4xbf16>, vector<4x32xbf16>, vector<16x32xf32> -> vector<16x32xf32>
    %127 = vector.shape_cast %126 : vector<16x32xf32> to vector<1x16x32xf32>
    %128 = arith.addf %13, %127 : vector<1x16x32xf32>
    %129 = vector.shape_cast %9 : vector<1x32xf32> to vector<1x1x32xf32>
    %130 = vector.broadcast %129 : vector<1x1x32xf32> to vector<1x16x32xf32>
    %131 = arith.addf %128, %130 : vector<1x16x32xf32>
    %cst_39 = arith.constant 0.000000e+00 : f32
    %132 = vector.broadcast %cst_39 : f32 to vector<1x16x32xf32>
    %133 = arith.maximumf %131, %132 : vector<1x16x32xf32>
    %134 = arith.truncf %133 : vector<1x16x32xf32> to vector<1x16x32xbf16>
    %135 = vector.shape_cast %134 : vector<1x16x32xbf16> to vector<16x32xbf16>
    %cst_40 = arith.constant dense<0.000000e+00> : vector<16x32xf32>
    %136 = tpu.matmul %135, %8, %cst_40 {dimension_numbers = #tpu.dot_dimension_numbers<[1], [0], [0], [1], [0, 0, 1, 1], [], []>} : vector<16x32xbf16>, vector<32x32xbf16>, vector<16x32xf32> -> vector<16x32xf32>
    %137 = vector.shape_cast %136 : vector<16x32xf32> to vector<1x16x32xf32>
    %138 = vector.shape_cast %10 : vector<1x32xf32> to vector<1x1x32xf32>
    %139 = vector.broadcast %138 : vector<1x1x32xf32> to vector<1x16x32xf32>
    %140 = arith.addf %137, %139 : vector<1x16x32xf32>
    %cst_41 = arith.constant 0.000000e+00 : f32
    %141 = vector.broadcast %cst_41 : f32 to vector<1x16x32xf32>
    %142 = arith.maximumf %140, %141 : vector<1x16x32xf32>
    %143 = arith.maximumf %104, %142 : vector<1x16x32xf32>
    %cst_42 = arith.constant dense<0x7F800000> : vector<1x16xf32>
    %144 = vector.multi_reduction <minimumf>, %119, %cst_42 [2] : vector<1x16x16xf32> to vector<1x16xf32>
    %145 = vector.shape_cast %144 : vector<1x16xf32> to vector<1x16x1xf32>
    %146 = vector.broadcast %145 : vector<1x16x1xf32> to vector<1x16x16xf32>
    %147 = arith.cmpf ole, %119, %146 : vector<1x16x16xf32>
    %c16_i32_43 = arith.constant 16 : i32
    %148 = vector.shape_cast %27 : vector<1x1x16xi32> to vector<1x1x16xi32>
    %149 = vector.broadcast %148 : vector<1x1x16xi32> to vector<1x16x16xi32>
    %150 = vector.broadcast %c16_i32_43 : i32 to vector<1x16x16xi32>
    %151 = arith.select %147, %149, %150 : vector<1x16x16xi1>, vector<1x16x16xi32>
    %cst_44 = arith.constant dense<2147483647> : vector<1x16xi32>
    %152 = vector.multi_reduction <minsi>, %151, %cst_44 [2] : vector<1x16x16xi32> to vector<1x16xi32>
    %153 = vector.shape_cast %152 : vector<1x16xi32> to vector<1x16x1xi32>
    %154 = vector.broadcast %27 : vector<1x1x16xi32> to vector<1x16x16xi32>
    %155 = vector.broadcast %153 : vector<1x16x1xi32> to vector<1x16x16xi32>
    %156 = arith.cmpi eq, %154, %155 : vector<1x16x16xi32>
    %157 = arith.extui %156 : vector<1x16x16xi1> to vector<1x16x16xi32>
    %158 = arith.sitofp %157 : vector<1x16x16xi32> to vector<1x16x16xf32>
    %159 = arith.truncf %158 : vector<1x16x16xf32> to vector<1x16x16xbf16>
    "tpu.trace_start"() <{level = 10 : i32, message = "brm,bmc->brc"}> : () -> ()
    %cst_45 = arith.constant dense<0.000000e+00> : vector<1x16x4xf32>
    %160 = tpu.matmul %159, %1, %cst_45 {dimension_numbers = #tpu.dot_dimension_numbers<[2], [1], [1], [2], [0, 0, 0, 1, 1, 2], [0], [0]>} : vector<1x16x16xbf16>, vector<1x16x4xbf16>, vector<1x16x4xf32> -> vector<1x16x4xf32>
    "tpu.trace_stop"() : () -> ()
    %161 = arith.truncf %160 : vector<1x16x4xf32> to vector<1x16x4xbf16>
    %162 = vector.shape_cast %161 : vector<1x16x4xbf16> to vector<16x4xbf16>
    %cst_46 = arith.constant dense<0.000000e+00> : vector<16x32xf32>
    %163 = tpu.matmul %162, %6, %cst_46 {dimension_numbers = #tpu.dot_dimension_numbers<[1], [0], [0], [1], [0, 0, 1, 1], [], []>} : vector<16x4xbf16>, vector<4x32xbf16>, vector<16x32xf32> -> vector<16x32xf32>
    %164 = vector.shape_cast %163 : vector<16x32xf32> to vector<1x16x32xf32>
    %165 = arith.addf %13, %164 : vector<1x16x32xf32>
    %166 = vector.shape_cast %9 : vector<1x32xf32> to vector<1x1x32xf32>
    %167 = vector.broadcast %166 : vector<1x1x32xf32> to vector<1x16x32xf32>
    %168 = arith.addf %165, %167 : vector<1x16x32xf32>
    %cst_47 = arith.constant 0.000000e+00 : f32
    %169 = vector.broadcast %cst_47 : f32 to vector<1x16x32xf32>
    %170 = arith.maximumf %168, %169 : vector<1x16x32xf32>
    %171 = arith.truncf %170 : vector<1x16x32xf32> to vector<1x16x32xbf16>
    %172 = vector.shape_cast %171 : vector<1x16x32xbf16> to vector<16x32xbf16>
    %cst_48 = arith.constant dense<0.000000e+00> : vector<16x32xf32>
    %173 = tpu.matmul %172, %8, %cst_48 {dimension_numbers = #tpu.dot_dimension_numbers<[1], [0], [0], [1], [0, 0, 1, 1], [], []>} : vector<16x32xbf16>, vector<32x32xbf16>, vector<16x32xf32> -> vector<16x32xf32>
    %174 = vector.shape_cast %173 : vector<16x32xf32> to vector<1x16x32xf32>
    %175 = vector.shape_cast %10 : vector<1x32xf32> to vector<1x1x32xf32>
    %176 = vector.broadcast %175 : vector<1x1x32xf32> to vector<1x16x32xf32>
    %177 = arith.addf %174, %176 : vector<1x16x32xf32>
    %cst_49 = arith.constant 0.000000e+00 : f32
    %178 = vector.broadcast %cst_49 : f32 to vector<1x16x32xf32>
    %179 = arith.maximumf %177, %178 : vector<1x16x32xf32>
    %180 = arith.maximumf %143, %179 : vector<1x16x32xf32>
    %181 = tpu.transpose %180, [0, 2, 1] : vector<1x16x32xf32> -> vector<1x32x16xf32>
    %c0_50 = arith.constant 0 : index
    %c0_51 = arith.constant 0 : index
    %c0_52 = arith.constant 0 : index
    %182 = vector.load %arg8[%c0_50, %c0_51, %c0_52] : memref<1x32x16xf32, #tpu.memory_space<vmem>>, vector<1x32x16xf32>
    tpu.vector_store %arg8[%c0_50, %c0_51, %c0_52], %181 {strides = array<i32>} : memref<1x32x16xf32, #tpu.memory_space<vmem>>, vector<1x32x16xf32>,
    return
  }
  func.func @transform_0(%arg0: i32, %arg1: i32) -> (i32, i32, i32) {
    %c0_i32 = arith.constant 0 : i32
    %c0_i32_0 = arith.constant 0 : i32
    %c0_i32_1 = arith.constant 0 : i32
    return %arg0, %c0_i32, %c0_i32_0 : i32, i32, i32
  }
  func.func @transform_1(%arg0: i32, %arg1: i32) -> (i32, i32) {
    %c0_i32 = arith.constant 0 : i32
    %c0_i32_0 = arith.constant 0 : i32
    %c0_i32_1 = arith.constant 0 : i32
    return %c0_i32, %c0_i32_0 : i32, i32
  }
  func.func @transform_2(%arg0: i32, %arg1: i32) -> (i32, i32) {
    %c0_i32 = arith.constant 0 : i32
    %c0_i32_0 = arith.constant 0 : i32
    %c0_i32_1 = arith.constant 0 : i32
    return %c0_i32, %c0_i32_0 : i32, i32
  }
  func.func @transform_3(%arg0: i32, %arg1: i32) -> (i32, i32) {
    %c0_i32 = arith.constant 0 : i32
    %c0_i32_0 = arith.constant 0 : i32
    %c0_i32_1 = arith.constant 0 : i32
    return %c0_i32, %c0_i32_0 : i32, i32
  }
  func.func @transform_4(%arg0: i32, %arg1: i32) -> (i32, i32) {
    %c0_i32 = arith.constant 0 : i32
    %c0_i32_0 = arith.constant 0 : i32
    %c0_i32_1 = arith.constant 0 : i32
    return %c0_i32, %c0_i32_0 : i32, i32
  }
  func.func @transform_5(%arg0: i32, %arg1: i32) -> (i32, i32) {
    %c0_i32 = arith.constant 0 : i32
    %c0_i32_0 = arith.constant 0 : i32
    %c0_i32_1 = arith.constant 0 : i32
    return %c0_i32, %c0_i32_0 : i32, i32
  }
  func.func @transform_6(%arg0: i32, %arg1: i32) -> (i32, i32, i32) {
    %c0_i32 = arith.constant 0 : i32
    %c0_i32_0 = arith.constant 0 : i32
    return %arg0, %c0_i32, %arg1 : i32, i32, i32
  }
}

</mosaic_0001>

<llo_original>
// kernel: tpu_custom_call.1
$region0: #{tpu_custom_call.1}
  #allocation0 [shape = 'u32[]', space=smem, size = 0x4, offset = 0x4, fixed_abs, tag = 'smem constant byte address 0x4 - core index']
  #allocation1 [shape = 'u32[144,128]{1,0:T(1,128)}', space=vmem, size = 0x12000, scoped, tag = 'internal scratch']
  %s0 = inlined_call_operand.vmem [shape: f32[2,16,4], index: 0, kind: input, shape index: {}]
  %s1 = inlined_call_operand.vmem [shape: f32[4,32], index: 1, kind: input, shape index: {}]
  %s2 = inlined_call_operand.vmem [shape: f32[4,32], index: 2, kind: input, shape index: {}]
  %s3 = inlined_call_operand.vmem [shape: f32[1,32], index: 3, kind: input, shape index: {}]
  %s4 = inlined_call_operand.vmem [shape: f32[32,32], index: 4, kind: input, shape index: {}]
  %s5 = inlined_call_operand.vmem [shape: f32[1,32], index: 5, kind: input, shape index: {}]
  %s6 = inlined_call_operand.vmem [shape: f32[2,32,16], index: 6, kind: output, shape index: {}]
  %s7 = sld [smem:[#allocation0]]
  $region57: #{tpu_custom_call.1} parent=0
    _
  %s9 = ssub.s32 1, %s7
  %s10 = scalar_select 0, %s9, %s7
  loop: start=0, step=1, limit=4
  $region2: #{tpu_custom_call.1} parent=0 // loop_pre_header
    _
  $region3: #{tpu_custom_call.1} parent=0 // loop_header
    %s12 = sphi 0, %s16
    %p13 = scmp.ge.s32.totalorder %s12, 4
    %s19 = sphi 0, %s31
    %s20 = sphi 0, %s27
    %s21 = sphi 0, %s19
    %s22 = sphi 0, %s20
    %s23 = sphi 0, %s21
    %s24 = sphi 0, %s22
    %s34 = sphi 0, %s36
    %s37 = sphi 0, %s34
    %s38 = sphi 0, %s37
    %s54 = sphi 0, %s38
    %s58 = sphi 0, %s58
    %s60 = sphi 0, %s58
    %s61 = sphi 0, %s60
    %s75 = sphi 0, %s61
    %s79 = sphi 0, %s79
    %s81 = sphi 0, %s79
    %s82 = sphi 0, %s81
    %s96 = sphi 0, %s82
    %s100 = sphi 0, %s100
    %s102 = sphi 0, %s100
    %s103 = sphi 0, %s102
    %s117 = sphi 0, %s103
    %s121 = sphi 0, %s121
    %s123 = sphi 0, %s121
    %s124 = sphi 0, %s123
    %s138 = sphi 0, %s124
    %s142 = sphi 0, %s142
    %s144 = sphi 0, %s142
    %s145 = sphi 0, %s144
    %s159 = sphi 0, %s145
    %s167 = sphi 0, %s169
    %s170 = sphi 0, %s167
    %s171 = sphi 0, %s170
    %s187 = sphi 0, %s171
  $region4: #{tpu_custom_call.1} parent=0 // loop_header_branch
    %15 = sbr.rel (%p13) target = $region8
  $region5: #{tpu_custom_call.1} parent=0 // loop_body
    %s17 = ssub.s32 %s12, 1
    %s18 = ssub.s32 %s12, 2
    %s25 = sadd.s32 1, %s20
    %p26 = scmp.ge.s32.totalorder %s25, 1
    %s27 = scalar_select %p26, 0, %s25
    %s28 = sadd.s32 1, %s19
    %s29 = scalar_select %p26, %s28, %s19
    %p30 = scmp.ge.s32.totalorder %s29, 2
    %s31 = scalar_select %p30, 0, %s29
    %s32 = ssub.s32 %s19, %s31
    %p33 = scmp.eq.s32.totalorder %s32, 0
    %s35 = sadd.s32 %s34, 1
    %s36 = scalar_select %p33, %s34, %s35
    %p39 = pneg %p33
    %p40 = scmp.eq.s32.totalorder %s12, 1
    %p41 = por %p39, %p40
    %p42 = scmp.ne.s32.totalorder %s34, %s37
    %p43 = scmp.eq.s32.totalorder %s12, 0
    %p44 = por %p42, %p43
    %p45 = scmp.ne.s32.totalorder %s34, %s37
    %p46 = scmp.eq.s32.totalorder %s17, 1
    %p47 = por %p45, %p46
    %p48 = scmp.ne.s32.totalorder %s37, %s38
    %p49 = scmp.eq.s32.totalorder %s17, 0
    %p50 = por %p48, %p49
    %p51 = scmp.ne.s32.totalorder %s37, %s38
    %p52 = scmp.eq.s32.totalorder %s18, 1
    %p53 = por %p51, %p52
    %p55 = scmp.ne.s32.totalorder %s38, %s54
    %p56 = scmp.eq.s32.totalorder %s18, 0
    %p57 = por %p55, %p56
    %s59 = sadd.s32 %s58, 1
    %p62 = scmp.eq.s32.totalorder %s12, 1
    %p63 = scmp.ne.s32.totalorder %s58, %s60
    %p64 = scmp.eq.s32.totalorder %s12, 0
    %p65 = por %p63, %p64
    %p66 = scmp.ne.s32.totalorder %s58, %s60
    %p67 = scmp.eq.s32.totalorder %s17, 1
    %p68 = por %p66, %p67
    %p69 = scmp.ne.s32.totalorder %s60, %s61
    %p70 = scmp.eq.s32.totalorder %s17, 0
    %p71 = por %p69, %p70
    %p72 = scmp.ne.s32.totalorder %s60, %s61
    %p73 = scmp.eq.s32.totalorder %s18, 1
    %p74 = por %p72, %p73
    %p76 = scmp.ne.s32.totalorder %s61, %s75
    %p77 = scmp.eq.s32.totalorder %s18, 0
    %p78 = por %p76, %p77
    %s80 = sadd.s32 %s79, 1
    %p83 = scmp.eq.s32.totalorder %s12, 1
    %p84 = scmp.ne.s32.totalorder %s79, %s81
    %p85 = scmp.eq.s32.totalorder %s12, 0
    %p86 = por %p84, %p85
    %p87 = scmp.ne.s32.totalorder %s79, %s81
    %p88 = scmp.eq.s32.totalorder %s17, 1
    %p89 = por %p87, %p88
    %p90 = scmp.ne.s32.totalorder %s81, %s82
    %p91 = scmp.eq.s32.totalorder %s17, 0
    %p92 = por %p90, %p91
    %p93 = scmp.ne.s32.totalorder %s81, %s82
    %p94 = scmp.eq.s32.totalorder %s18, 1
    %p95 = por %p93, %p94
    %p97 = scmp.ne.s32.totalorder %s82, %s96
    %p98 = scmp.eq.s32.totalorder %s18, 0
    %p99 = por %p97, %p98
    %s101 = sadd.s32 %s100, 1
    %p104 = scmp.eq.s32.totalorder %s12, 1
    %p105 = scmp.ne.s32.totalorder %s100, %s102
    %p106 = scmp.eq.s32.totalorder %s12, 0
    %p107 = por %p105, %p106
    %p108 = scmp.ne.s32.totalorder %s100, %s102
    %p109 = scmp.eq.s32.totalorder %s17, 1
    %p110 = por %p108, %p109
    %p111 = scmp.ne.s32.totalorder %s102, %s103
    %p112 = scmp.eq.s32.totalorder %s17, 0
    %p113 = por %p111, %p112
    %p114 = scmp.ne.s32.totalorder %s102, %s103
    %p115 = scmp.eq.s32.totalorder %s18, 1
    %p116 = por %p114, %p115
    %p118 = scmp.ne.s32.totalorder %s103, %s117
    %p119 = scmp.eq.s32.totalorder %s18, 0
    %p120 = por %p118, %p119
    %s122 = sadd.s32 %s121, 1
    %p125 = scmp.eq.s32.totalorder %s12, 1
    %p126 = scmp.ne.s32.totalorder %s121, %s123
    %p127 = scmp.eq.s32.totalorder %s12, 0
    %p128 = por %p126, %p127
    %p129 = scmp.ne.s32.totalorder %s121, %s123
    %p130 = scmp.eq.s32.totalorder %s17, 1
    %p131 = por %p129, %p130
    %p132 = scmp.ne.s32.totalorder %s123, %s124
    %p133 = scmp.eq.s32.totalorder %s17, 0
    %p134 = por %p132, %p133
    %p135 = scmp.ne.s32.totalorder %s123, %s124
    %p136 = scmp.eq.s32.totalorder %s18, 1
    %p137 = por %p135, %p136
    %p139 = scmp.ne.s32.totalorder %s124, %s138
    %p140 = scmp.eq.s32.totalorder %s18, 0
    %p141 = por %p139, %p140
    %s143 = sadd.s32 %s142, 1
    %p146 = scmp.eq.s32.totalorder %s12, 1
    %p147 = scmp.ne.s32.totalorder %s142, %s144
    %p148 = scmp.eq.s32.totalorder %s12, 0
    %p149 = por %p147, %p148
    %p150 = scmp.ne.s32.totalorder %s142, %s144
    %p151 = scmp.eq.s32.totalorder %s17, 1
    %p152 = por %p150, %p151
    %p153 = scmp.ne.s32.totalorder %s144, %s145
    %p154 = scmp.eq.s32.totalorder %s17, 0
    %p155 = por %p153, %p154
    %p156 = scmp.ne.s32.totalorder %s144, %s145
    %p157 = scmp.eq.s32.totalorder %s18, 1
    %p158 = por %p156, %p157
    %p160 = scmp.ne.s32.totalorder %s145, %s159
    %p161 = scmp.eq.s32.totalorder %s18, 0
    %p162 = por %p160, %p161
    %s163 = ssub.s32 %s19, %s31
    %s164 = ssub.s32 %s20, %s27
    %s165 = sor.u32 %s163, %s164
    %p166 = scmp.eq.s32.totalorder %s165, 0
    %s168 = sadd.s32 %s167, 1
    %s169 = scalar_select %p166, %s167, %s168
    %p172 = pneg %p166
    %p173 = scmp.eq.s32.totalorder %s12, 1
    %p174 = por %p172, %p173
    %p175 = scmp.ne.s32.totalorder %s167, %s170
    %p176 = scmp.eq.s32.totalorder %s12, 0
    %p177 = por %p175, %p176
    %p178 = scmp.ne.s32.totalorder %s167, %s170
    %p179 = scmp.eq.s32.totalorder %s17, 1
    %p180 = por %p178, %p179
    %p181 = scmp.ne.s32.totalorder %s170, %s171
    %p182 = scmp.eq.s32.totalorder %s17, 0
    %p183 = por %p181, %p182
    %p184 = scmp.ne.s32.totalorder %s170, %s171
    %p185 = scmp.eq.s32.totalorder %s18, 1
    %p186 = por %p184, %p185
    %p188 = scmp.ne.s32.totalorder %s171, %s187
    %p189 = scmp.eq.s32.totalorder %s18, 0
    %p190 = por %p188, %p189
    %p191 = scmp.le.s32.totalorder 1, %s12
    %p192 = scmp.lt.s32.totalorder %s12, 3
    %p193 = pnand %p191, %p192
    %p194 = pneg %p193
    // Predicated region
    $region9: #{tpu_custom_call.1} parent=5 // pred_check
      _
    $region10: #{tpu_custom_call.1} parent=5 // pred_check_branch
      %196 = sbr.rel (%p193) target = $region12
    $region11: #{tpu_custom_call.1} parent=5 // pred_region
      %s197 = ssub.s32 %s12, 1
      // Predicated region
      $region13: #{tpu_custom_call.1} parent=11 // pred_check
        %p198 = pneg %p71
      $region14: #{tpu_custom_call.1} parent=11 // pred_check_branch
        %200 = sbr.rel (%p198) target = $region16
      $region15: #{tpu_custom_call.1} parent=11 // pred_region
        _
      $region16: #{tpu_custom_call.1} parent=11 // pred_fallthru
        _
      // Predicated region
      $region17: #{tpu_custom_call.1} parent=11 // pred_check
        %p201 = pneg %p92
      $region18: #{tpu_custom_call.1} parent=11 // pred_check_branch
        %203 = sbr.rel (%p201) target = $region20
      $region19: #{tpu_custom_call.1} parent=11 // pred_region
        _
      $region20: #{tpu_custom_call.1} parent=11 // pred_fallthru
        _
      // Predicated region
      $region21: #{tpu_custom_call.1} parent=11 // pred_check
        %p204 = pneg %p113
      $region22: #{tpu_custom_call.1} parent=11 // pred_check_branch
        %206 = sbr.rel (%p204) target = $region24
      $region23: #{tpu_custom_call.1} parent=11 // pred_region
        _
      $region24: #{tpu_custom_call.1} parent=11 // pred_fallthru
        _
      // Predicated region
      $region25: #{tpu_custom_call.1} parent=11 // pred_check
        %p207 = pneg %p134
      $region26: #{tpu_custom_call.1} parent=11 // pred_check_branch
        %209 = sbr.rel (%p207) target = $region28
      $region27: #{tpu_custom_call.1} parent=11 // pred_region
        _
      $region28: #{tpu_custom_call.1} parent=11 // pred_fallthru
        _
      // Predicated region
      $region29: #{tpu_custom_call.1} parent=11 // pred_check
        %p210 = pneg %p155
      $region30: #{tpu_custom_call.1} parent=11 // pred_check_branch
        %212 = sbr.rel (%p210) target = $region32
      $region31: #{tpu_custom_call.1} parent=11 // pred_region
        _
      $region32: #{tpu_custom_call.1} parent=11 // pred_fallthru
        _
    $region12: #{tpu_custom_call.1} parent=5 // pred_fallthru
      _
    %p213 = scmp.lt.s32.totalorder %s12, 2
    // Predicated region
    $region33: #{tpu_custom_call.1} parent=5 // pred_check
      %p214 = pneg %p213
    $region34: #{tpu_custom_call.1} parent=5 // pred_check_branch
      %216 = sbr.rel (%p214) target = $region36
    $region35: #{tpu_custom_call.1} parent=5 // pred_region
      // Predicated region
      $region37: #{tpu_custom_call.1} parent=35 // pred_check
        %p217 = pneg %p44
      $region38: #{tpu_custom_call.1} parent=35 // pred_check_branch
        %219 = sbr.rel (%p217) target = $region40
      $region39: #{tpu_custom_call.1} parent=35 // pred_region
        %p220 = scmp.lt.s32.totalorder %s19, 1
        %s221 = scalar_select %p220, %s19, 1
        %s222 = smul.addr %s221, 2
        %s223 = smul.addr %s222, 8
        %s224 = scalar_lea.vmem %s0, %s223
      $region40: #{tpu_custom_call.1} parent=35 // pred_fallthru
        _
    $region36: #{tpu_custom_call.1} parent=5 // pred_fallthru
      _
    %p225 = scmp.le.s32.totalorder 1, %s12
    %p226 = scmp.lt.s32.totalorder %s12, 3
    %p227 = pnand %p225, %p226
    %p228 = pneg %p227
    // Predicated region
    $region41: #{tpu_custom_call.1} parent=5 // pred_check
      _
    $region42: #{tpu_custom_call.1} parent=5 // pred_check_branch
      %230 = sbr.rel (%p227) target = $region44
    $region43: #{tpu_custom_call.1} parent=5 // pred_region
      %s231 = ssub.s32 %s12, 1
      %p232 = scmp.lt.s32.totalorder %s21, 1
      %s233 = scalar_select %p232, %s21, 1
      %s234 = smul.addr %s233, 2
      %s235 = smul.addr %s234, 8
      %s236 = scalar_lea.vmem %s0, %s235
      %p237 = pneg %p50
      %p238 = pneg %p47
      %p239 = pneg %p71
      %p240 = pneg %p68
      %p241 = pneg %p92
      %p242 = pneg %p89
      %p243 = pneg %p113
      %p244 = pneg %p110
      %p245 = pneg %p134
      %p246 = pneg %p131
      %p247 = pneg %p155
      %p248 = pneg %p152
      %p249 = pneg %p183
      %p250 = pneg %p180
      %p251 = scmp.lt.s32.totalorder %s21, 1
      %s252 = scalar_select %p251, %s21, 1
      %p253 = scmp.lt.s32.totalorder %s22, 0
      %s254 = scalar_select %p253, %s22, 0
      %s255 = smul.addr %s252, 4
      %s256 = sadd.s32 %s254, %s255
      %s257 = smul.addr %s256, 8
      %s258 = scalar_lea.vmem %s6, %s257
      %p259 = scmp.lt.s32.totalorder %s21, 1
      %s260 = scalar_select %p259, %s21, 1
      %s261 = smul.addr %s260, 2
      %s262 = smul.addr %s261, 8
      %s263 = scalar_lea.vmem %s0, %s262
      %p264 = scmp.lt.s32.totalorder %s21, 1
      %s265 = scalar_select %p264, %s21, 1
      %p266 = scmp.lt.s32.totalorder %s22, 0
      %s267 = scalar_select %p266, %s22, 0
      %s268 = smul.addr %s265, 4
      %s269 = sadd.s32 %s267, %s268
      %s270 = smul.addr %s269, 8
      %s271 = scalar_lea.vmem %s6, %s270
      %v273 = vld [vmem:[%s263] sm:$0xff]
      %v274 = vld [vmem:[%s263 + $0x8] sm:$0xff]
      %v275 = vpack.c.bf16 %v274, %v273
      %v276 = vld [vmem:[%s1] sm:$0xf]
      %v277 = vpack.c.bf16 %v276, %v276
      %v278 = vld [vmem:[%s2] sm:$0xf]
      %v279 = vpack.c.bf16 %v278, %v278
      %v280 = vld [vmem:[%s4] sm:$0xff]
      %v281 = vld [vmem:[%s4 + $0x8] sm:$0xff]
      %v282 = vld [vmem:[%s4 + $0x10] sm:$0xff]
      %v283 = vld [vmem:[%s4 + $0x18] sm:$0xff]
      %v284 = vpack.c.bf16 %v281, %v280
      %v285 = vpack.c.bf16 %v283, %v282
      %v286 = vld [vmem:[%s3] sm:$0x1]
      %v287 = vld [vmem:[%s5] sm:$0x1]
      %vm288 = vcmask 31744
      %v290 = vsel %vm288, %v275, 0
      %vm292 = vcmask 1041408
      %v294 = vsel %vm292, %v277, 0
      %296 = vmatprep.subr.bf16.mxu0 0
      %297 = vmatpush1.bf16.msra.mxu0 0
      %298 = vmatprep.subr.bf16.mxu0 0
      %299 = vmatpush1.bf16.msra.mxu0 0
      %300 = vmatprep.subr.bf16.mxu0 0
      %301 = vmatpush1.bf16.msra.mxu0 0
      %302 = vmatprep.subr.bf16.mxu0 0
      %303 = vmatpush1.bf16.msra.mxu0 0
      %304 = vmatprep.subr.bf16.mxu0 0
      %305 = vmatpush1.bf16.msra.mxu0 0
      %306 = vmatprep.subr.bf16.mxu0 0
      %307 = vmatpush1.bf16.msra.mxu0 0
      %308 = vmatprep.subr.bf16.mxu0 0
      %309 = vmatpush1.bf16.msra.mxu0 0
      %310 = vmatprep.subr.bf16.mxu0 0
      %311 = vmatpush1.bf16.msra.mxu0 %v294
      %312 = vmatprep.subr.bf16.mxu0 0
      %313 = vmatpush2.bf16.msra.mxu0 0
      %314 = vmatprep.subr.bf16.mxu0 0
      %315 = vmatpush2.bf16.msra.mxu0 0
      %316 = vmatprep.subr.bf16.mxu0 0
      %317 = vmatpush2.bf16.msra.mxu0 0
      %318 = vmatprep.subr.bf16.mxu0 0
      %319 = vmatpush2.bf16.msra.mxu0 0
      %320 = vmatprep.subr.bf16.mxu0 0
      %321 = vmatpush2.bf16.msra.mxu0 0
      %322 = vmatprep.subr.bf16.mxu0 0
      %323 = vmatpush2.bf16.msra.mxu0 0
      %324 = vmatprep.subr.bf16.mxu0 0
      %325 = vmatpush2.bf16.msra.mxu0 0
      %326 = vmatprep.subr.bf16.mxu0 0
      %327 = vmatpush2.bf16.msra.mxu0 0
      %328 = vmatprep.mubr.bf16.mxu0 0
      %329 = vmatmul.mubr.bf16.gmra.mxu0 %v290
      %v330 = vpop.f32.mrf.mxu0
      %v331 = vadd.f32 0.0, %v330
      %v332 = vpop.f32.mrf.mxu0
      %v333 = vpop.f32.mrf.mxu0
      %v334 = vadd.f32 0.0, %v333
      %v335 = vpop.f32.mrf.mxu0
      %336 = vdwg.mxu0
      %v338 = vsel %vm288, %v273, 0
      %v341 = vsel %vm288, %v274, 0
      %343 = vmatprep.subr.mxu0 0.0
      %344 = vmatpush1.xpose.msra.mxu0 0.0
      %345 = vmatprep.subr.mxu0 0.0
      %346 = vmatpush1.xpose.msra.mxu0 0.0
      %347 = vmatprep.subr.mxu0 0.0
      %348 = vmatpush1.xpose.msra.mxu0 0.0
      %349 = vmatprep.subr.mxu0 0.0
      %350 = vmatpush1.xpose.msra.mxu0 0.0
      %351 = vmatprep.subr.mxu0 0.0
      %352 = vmatpush1.xpose.msra.mxu0 0.0
      %353 = vmatprep.subr.mxu0 0.0
      %354 = vmatpush1.xpose.msra.mxu0 0.0
      %355 = vmatprep.subr.mxu0 0.0
      %356 = vmatpush1.xpose.msra.mxu0 0.0
      %357 = vmatprep.subr.mxu0 0.0
      %358 = vmatpush1.xpose.msra.mxu0 0.0
      %359 = vmatprep.subr.mxu0 0.0
      %360 = vmatpush1.xpose.msra.mxu0 0.0
      %361 = vmatprep.subr.mxu0 0.0
      %362 = vmatpush1.xpose.msra.mxu0 0.0
      %363 = vmatprep.subr.mxu0 0.0
      %364 = vmatpush1.xpose.msra.mxu0 0.0
      %365 = vmatprep.subr.mxu0 0.0
      %366 = vmatpush1.xpose.msra.mxu0 0.0
      %367 = vmatprep.subr.mxu0 0.0
      %368 = vmatpush1.xpose.msra.mxu0 0.0
      %369 = vmatprep.subr.mxu0 0.0
      %370 = vmatpush1.xpose.msra.mxu0 0.0
      %371 = vmatprep.subr.mxu0 0.0
      %372 = vmatpush1.xpose.msra.mxu0 %v341
      %373 = vmatprep.subr.mxu0 0.0
      %374 = vmatpush1.xpose.msra.mxu0 %v338
      %375 = vmatprep.subr.mxu0 0.0
      %376 = vmatpush2.xpose.msra.mxu0 0.0
      %377 = vmatprep.subr.mxu0 0.0
      %378 = vmatpush2.xpose.msra.mxu0 0.0
      %379 = vmatprep.subr.mxu0 0.0
      %380 = vmatpush2.xpose.msra.mxu0 0.0
      %381 = vmatprep.subr.mxu0 0.0
      %382 = vmatpush2.xpose.msra.mxu0 0.0
      %383 = vmatprep.subr.mxu0 0.0
      %384 = vmatpush2.xpose.msra.mxu0 0.0
      %385 = vmatprep.subr.mxu0 0.0
      %386 = vmatpush2.xpose.msra.mxu0 0.0
      %387 = vmatprep.subr.mxu0 0.0
      %388 = vmatpush2.xpose.msra.mxu0 0.0
      %389 = vmatprep.subr.mxu0 0.0
      %390 = vmatpush2.xpose.msra.mxu0 0.0
      %391 = vmatprep.subr.mxu0 0.0
      %392 = vmatpush2.xpose.msra.mxu0 0.0
      %393 = vmatprep.subr.mxu0 0.0
      %394 = vmatpush2.xpose.msra.mxu0 0.0
      %395 = vmatprep.subr.mxu0 0.0
      %396 = vmatpush2.xpose.msra.mxu0 0.0
      %397 = vmatprep.subr.mxu0 0.0
      %398 = vmatpush2.xpose.msra.mxu0 0.0
      %399 = vmatprep.subr.mxu0 0.0
      %400 = vmatpush2.xpose.msra.mxu0 0.0
      %401 = vmatprep.subr.mxu0 0.0
      %402 = vmatpush2.xpose.msra.mxu0 0.0
      %403 = vmatprep.subr.mxu0 0.0
      %404 = vmatpush2.xpose.msra.mxu0 0.0
      %405 = vmatprep.subr.mxu0 0.0
      %406 = vmatpush2.xpose.msra.mxu0 0.0
      %407 = vmatprep.mubr.f32.mxu0 0.0
      %408 = vmatmul.mubr.f32.gmra.mxu0 %v338
      %v409 = vpop.f32.mrf.mxu0
      %v410 = vadd.f32 0.0, %v409
      %v411 = vpop.f32.mrf.mxu0
      %412 = vmatprep.mubr.f32.mxu0 0.0
      %413 = vmatmul.mubr.f32.gmra.mxu0 %v341
      %v414 = vpop.f32.mrf.mxu0
      %v415 = vadd.f32 0.0, %v414
      %v416 = vpop.f32.mrf.mxu0
      %417 = vdwg.mxu0
      %v418 = vmul.f32 %v273, %v273
      %v419 = vmul.f32 %v274, %v274
      %v420 = vsel %vm288, %v418, 0.0
      %421 = vadd.xlane.f32.xlu0 %v420
      %v422 = vpop.xlane.xlu0 %421
      %v423 = vsel %vm288, %v419, 0.0
      %424 = vadd.xlane.f32.xlu0 %v423
      %v425 = vpop.xlane.xlu0 %424
      %v428 = vlaneseq
      %v429 = vand.u32 %v428, 127
      %v430 = vlaneseq
      %v431 = vshrl.u32 %v430, 7
      %v432 = vsub.s32 %v429, %v431
      %v433 = vrot.slane %v422, %v432
      %v434 = vadd.s32 %v429, 4294967288
      %v435 = vlaneseq
      %v436 = vshrl.u32 %v435, 7
      %v437 = vsub.s32 %v434, %v436
      %v438 = vrot.slane %v425, %v437
      %vm439 = vcmask 130112
      %v440 = vsel %vm439, %v438, %v433
      %vm441 = vcmask 1042434
      %v442 = vsel %vm441, %v440, %v440
      %vm443 = vcmask 1043459
      %v444 = vsel %vm443, %v440, %v442
      %vm445 = vcmask 1044484
      %v446 = vsel %vm445, %v440, %v444
      %vm447 = vcmask 1045509
      %v448 = vsel %vm447, %v440, %v446
      %vm449 = vcmask 1046534
      %v450 = vsel %vm449, %v440, %v448
      %vm451 = vcmask 1047559
      %v452 = vsel %vm451, %v440, %v450
      %v454 = vadd.f32 %v422, %v452
      %v455 = vadd.f32 %v425, %v452
      %v456 = vmul.f32 %v410, 2.0
      %v457 = vmul.f32 %v415, 2.0
      %v458 = vsub.f32 %v454, %v456
      %v459 = vsub.f32 %v455, %v457
      %vm460 = vcmask 130048
      %v461 = vsel %vm460, %v458, inf
      %462 = vmin.xlane.f32.xlu0 %v461
      %v463 = vpop.xlane.xlu0 %462
      %v464 = vsel %vm460, %v459, inf
      %465 = vmin.xlane.f32.xlu0 %v464
      %v466 = vpop.xlane.xlu0 %465
      %vm467 = vcmp.le.f32.partialorder %v458, %v463
      %vm468 = vcmp.le.f32.partialorder %v459, %v466
      %v469 = vsel %vm467, %v429, 16
      %v470 = vsel %vm468, %v429, 16
      %v471 = vsel %vm460, %v469, 2147483647
      %v472 = vand.u32 %v471, 65535
      %v473 = vshra.s32 %v471, 16
      %v474 = vcvt.s32.f32 %v472
      %v475 = vcvt.s32.f32 %v473
      %476 = vmin.xlane.f32.xlu0 %v475
      %v477 = vpop.xlane.xlu0 %476
      %vm478 = vcmp.eq.f32.partialorder %v475, %v477
      %v479 = vsel %vm478, %v474, inf
      %480 = vmin.xlane.f32.xlu0 %v479
      %v481 = vpop.xlane.xlu0 %480
      %v482 = vcvt.f32.s32 %v481
      %v483 = vcvt.f32.s32 %v477
      %v484 = vshll.u32 %v483, 16
      %v485 = vadd.s32 %v484, %v482
      %v486 = vsel %vm460, %v470, 2147483647
      %v487 = vand.u32 %v486, 65535
      %v488 = vshra.s32 %v486, 16
      %v489 = vcvt.s32.f32 %v487
      %v490 = vcvt.s32.f32 %v488
      %491 = vmin.xlane.f32.xlu0 %v490
      %v492 = vpop.xlane.xlu0 %491
      %vm493 = vcmp.eq.f32.partialorder %v490, %v492
      %v494 = vsel %vm493, %v489, inf
      %495 = vmin.xlane.f32.xlu0 %v494
      %v496 = vpop.xlane.xlu0 %495
      %v497 = vcvt.f32.s32 %v496
      %v498 = vcvt.f32.s32 %v492
      %v499 = vshll.u32 %v498, 16
      %v500 = vadd.s32 %v499, %v497
      %vm501 = vcmp.eq.s32.totalorder %v429, %v485
      %vm502 = vcmp.eq.s32.totalorder %v429, %v500
      %v503 = vsel %vm501, inf, %v458
      %v504 = vsel %vm502, inf, %v459
      %v505 = vsel %vm501, 1, 0
      %v506 = vsel %vm502, 1, 0
      %v507 = vcvt.s32.f32 %v505
      %v508 = vcvt.s32.f32 %v506
      %v509 = vpack.c.bf16 %v508, %v507
      %v511 = vsel %vm460, %v509, 0
      %513 = vmatprep.subr.bf16.mxu0 0
      %514 = vmatpush1.bf16.msra.mxu0 0
      %515 = vmatprep.subr.bf16.mxu0 0
      %516 = vmatpush1.bf16.msra.mxu0 0
      %517 = vmatprep.subr.bf16.mxu0 0
      %518 = vmatpush1.bf16.msra.mxu0 0
      %519 = vmatprep.subr.bf16.mxu0 0
      %520 = vmatpush1.bf16.msra.mxu0 0
      %521 = vmatprep.subr.bf16.mxu0 0
      %522 = vmatpush1.bf16.msra.mxu0 0
      %523 = vmatprep.subr.bf16.mxu0 0
      %524 = vmatpush1.bf16.msra.mxu0 0
      %525 = vmatprep.subr.bf16.mxu0 0
      %526 = vmatpush1.bf16.msra.mxu0 0
      %527 = vmatprep.subr.bf16.mxu0 0
      %528 = vmatpush1.bf16.msra.mxu0 %v275
      %529 = vmatprep.subr.bf16.mxu0 0
      %530 = vmatpush2.bf16.msra.mxu0 0
      %531 = vmatprep.subr.bf16.mxu0 0
      %532 = vmatpush2.bf16.msra.mxu0 0
      %533 = vmatprep.subr.bf16.mxu0 0
      %534 = vmatpush2.bf16.msra.mxu0 0
      %535 = vmatprep.subr.bf16.mxu0 0
      %536 = vmatpush2.bf16.msra.mxu0 0
      %537 = vmatprep.subr.bf16.mxu0 0
      %538 = vmatpush2.bf16.msra.mxu0 0
      %539 = vmatprep.subr.bf16.mxu0 0
      %540 = vmatpush2.bf16.msra.mxu0 0
      %541 = vmatprep.subr.bf16.mxu0 0
      %542 = vmatpush2.bf16.msra.mxu0 0
      %543 = vmatprep.subr.bf16.mxu0 0
      %544 = vmatpush2.bf16.msra.mxu0 0
      %545 = vmatprep.mubr.bf16.mxu0 0
      %546 = vmatmul.mubr.bf16.gmra.mxu0 %v511
      %v547 = vpop.f32.mrf.mxu0
      %v548 = vadd.f32 0.0, %v547
      %v549 = vpop.f32.mrf.mxu0
      %v550 = vpop.f32.mrf.mxu0
      %v551 = vadd.f32 0.0, %v550
      %v552 = vpop.f32.mrf.mxu0
      %553 = vdwg.mxu0
      %v554 = vpack.c.bf16 %v551, %v548
      %v556 = vsel %vm288, %v554, 0
      %v559 = vsel %vm292, %v279, 0
      %561 = vmatprep.subr.bf16.mxu0 0
      %562 = vmatpush1.bf16.msra.mxu0 0
      %563 = vmatprep.subr.bf16.mxu0 0
      %564 = vmatpush1.bf16.msra.mxu0 0
      %565 = vmatprep.subr.bf16.mxu0 0
      %566 = vmatpush1.bf16.msra.mxu0 0
      %567 = vmatprep.subr.bf16.mxu0 0
      %568 = vmatpush1.bf16.msra.mxu0 0
      %569 = vmatprep.subr.bf16.mxu0 0
      %570 = vmatpush1.bf16.msra.mxu0 0
      %571 = vmatprep.subr.bf16.mxu0 0
      %572 = vmatpush1.bf16.msra.mxu0 0
      %573 = vmatprep.subr.bf16.mxu0 0
      %574 = vmatpush1.bf16.msra.mxu0 0
      %575 = vmatprep.subr.bf16.mxu0 0
      %576 = vmatpush1.bf16.msra.mxu0 %v559
      %577 = vmatprep.subr.bf16.mxu0 0
      %578 = vmatpush2.bf16.msra.mxu0 0
      %579 = vmatprep.subr.bf16.mxu0 0
      %580 = vmatpush2.bf16.msra.mxu0 0
      %581 = vmatprep.subr.bf16.mxu0 0
      %582 = vmatpush2.bf16.msra.mxu0 0
      %583 = vmatprep.subr.bf16.mxu0 0
      %584 = vmatpush2.bf16.msra.mxu0 0
      %585 = vmatprep.subr.bf16.mxu0 0
      %586 = vmatpush2.bf16.msra.mxu0 0
      %587 = vmatprep.subr.bf16.mxu0 0
      %588 = vmatpush2.bf16.msra.mxu0 0
      %589 = vmatprep.subr.bf16.mxu0 0
      %590 = vmatpush2.bf16.msra.mxu0 0
      %591 = vmatprep.subr.bf16.mxu0 0
      %592 = vmatpush2.bf16.msra.mxu0 0
      %593 = vmatprep.mubr.bf16.mxu0 0
      %594 = vmatmul.mubr.bf16.gmra.mxu0 %v556
      %v595 = vpop.f32.mrf.mxu0
      %v596 = vadd.f32 0.0, %v595
      %v597 = vpop.f32.mrf.mxu0
      %v598 = vpop.f32.mrf.mxu0
      %v599 = vadd.f32 0.0, %v598
      %v600 = vpop.f32.mrf.mxu0
      %601 = vdwg.mxu0
      %v602 = vadd.f32 %v331, %v596
      %v603 = vadd.f32 %v334, %v599
      %v605 = vlaneseq
      %v606 = vshrl.u32 %v605, 7
      %v607 = vsub.s32 0, %v606
      %v608 = vrot.slane %v286, %v607
      %v610 = vadd.f32 %v602, %v608
      %v611 = vadd.f32 %v603, %v608
      %v612 = vmax.f32 %v610, 0.0
      %v613 = vmax.f32 %v611, 0.0
      %v614 = vpack.c.bf16 %v613, %v612
      %vm615 = vcmask 261120
      %v617 = vsel %vm615, %v614, 0
      %619 = vmatprep.subr.bf16.mxu0 0
      %620 = vmatpush1.bf16.msra.mxu0 0
      %621 = vmatprep.subr.bf16.mxu0 0
      %622 = vmatpush1.bf16.msra.mxu0 0
      %623 = vmatprep.subr.bf16.mxu0 0
      %624 = vmatpush1.bf16.msra.mxu0 0
      %625 = vmatprep.subr.bf16.mxu0 0
      %626 = vmatpush1.bf16.msra.mxu0 0
      %627 = vmatprep.subr.bf16.mxu0 0
      %628 = vmatpush1.bf16.msra.mxu0 0
      %629 = vmatprep.subr.bf16.mxu0 0
      %630 = vmatpush1.bf16.msra.mxu0 0
      %631 = vmatprep.subr.bf16.mxu0 0
      %632 = vmatpush1.bf16.msra.mxu0 %v285
      %633 = vmatprep.subr.bf16.mxu0 0
      %634 = vmatpush1.bf16.msra.mxu0 %v284
      %635 = vmatprep.subr.bf16.mxu0 0
      %636 = vmatpush2.bf16.msra.mxu0 0
      %637 = vmatprep.subr.bf16.mxu0 0
      %638 = vmatpush2.bf16.msra.mxu0 0
      %639 = vmatprep.subr.bf16.mxu0 0
      %640 = vmatpush2.bf16.msra.mxu0 0
      %641 = vmatprep.subr.bf16.mxu0 0
      %642 = vmatpush2.bf16.msra.mxu0 0
      %643 = vmatprep.subr.bf16.mxu0 0
      %644 = vmatpush2.bf16.msra.mxu0 0
      %645 = vmatprep.subr.bf16.mxu0 0
      %646 = vmatpush2.bf16.msra.mxu0 0
      %647 = vmatprep.subr.bf16.mxu0 0
      %648 = vmatpush2.bf16.msra.mxu0 0
      %649 = vmatprep.subr.bf16.mxu0 0
      %650 = vmatpush2.bf16.msra.mxu0 0
      %651 = vmatprep.mubr.bf16.mxu0 0
      %652 = vmatmul.mubr.bf16.gmra.mxu0 %v617
      %v653 = vpop.f32.mrf.mxu0
      %v654 = vadd.f32 0.0, %v653
      %v655 = vpop.f32.mrf.mxu0
      %v656 = vpop.f32.mrf.mxu0
      %v657 = vadd.f32 0.0, %v656
      %v658 = vpop.f32.mrf.mxu0
      %659 = vdwg.mxu0
      %v661 = vlaneseq
      %v662 = vshrl.u32 %v661, 7
      %v663 = vsub.s32 0, %v662
      %v664 = vrot.slane %v287, %v663
      %v666 = vadd.f32 %v654, %v664
      %v667 = vadd.f32 %v657, %v664
      %v668 = vmax.f32 %v666, 0.0
      %v669 = vmax.f32 %v667, 0.0
      %v670 = vsel %vm460, %v503, inf
      %671 = vmin.xlane.f32.xlu0 %v670
      %v672 = vpop.xlane.xlu0 %671
      %v673 = vsel %vm460, %v504, inf
      %674 = vmin.xlane.f32.xlu0 %v673
      %v675 = vpop.xlane.xlu0 %674
      %vm676 = vcmp.le.f32.partialorder %v503, %v672
      %vm677 = vcmp.le.f32.partialorder %v504, %v675
      %v678 = vsel %vm676, %v429, 16
      %v679 = vsel %vm677, %v429, 16
      %v680 = vsel %vm460, %v678, 2147483647
      %v681 = vand.u32 %v680, 65535
      %v682 = vshra.s32 %v680, 16
      %v683 = vcvt.s32.f32 %v681
      %v684 = vcvt.s32.f32 %v682
      %685 = vmin.xlane.f32.xlu0 %v684
      %v686 = vpop.xlane.xlu0 %685
      %vm687 = vcmp.eq.f32.partialorder %v684, %v686
      %v688 = vsel %vm687, %v683, inf
      %689 = vmin.xlane.f32.xlu0 %v688
      %v690 = vpop.xlane.xlu0 %689
      %v691 = vcvt.f32.s32 %v690
      %v692 = vcvt.f32.s32 %v686
      %v693 = vshll.u32 %v692, 16
      %v694 = vadd.s32 %v693, %v691
      %v695 = vsel %vm460, %v679, 2147483647
      %v696 = vand.u32 %v695, 65535
      %v697 = vshra.s32 %v695, 16
      %v698 = vcvt.s32.f32 %v696
      %v699 = vcvt.s32.f32 %v697
      %700 = vmin.xlane.f32.xlu0 %v699
      %v701 = vpop.xlane.xlu0 %700
      %vm702 = vcmp.eq.f32.partialorder %v699, %v701
      %v703 = vsel %vm702, %v698, inf
      %704 = vmin.xlane.f32.xlu0 %v703
      %v705 = vpop.xlane.xlu0 %704
      %v706 = vcvt.f32.s32 %v705
      %v707 = vcvt.f32.s32 %v701
      %v708 = vshll.u32 %v707, 16
      %v709 = vadd.s32 %v708, %v706
      %vm710 = vcmp.eq.s32.totalorder %v429, %v694
      %vm711 = vcmp.eq.s32.totalorder %v429, %v709
      %v712 = vsel %vm710, inf, %v503
      %v713 = vsel %vm711, inf, %v504
      %v714 = vsel %vm710, 1, 0
      %v715 = vsel %vm711, 1, 0
      %v716 = vcvt.s32.f32 %v714
      %v717 = vcvt.s32.f32 %v715
      %v718 = vpack.c.bf16 %v717, %v716
      %v720 = vsel %vm460, %v718, 0
      %722 = vmatprep.subr.bf16.mxu0 0
      %723 = vmatpush1.bf16.msra.mxu0 0
      %724 = vmatprep.subr.bf16.mxu0 0
      %725 = vmatpush1.bf16.msra.mxu0 0
      %726 = vmatprep.subr.bf16.mxu0 0
      %727 = vmatpush1.bf16.msra.mxu0 0
      %728 = vmatprep.subr.bf16.mxu0 0
      %729 = vmatpush1.bf16.msra.mxu0 0
      %730 = vmatprep.subr.bf16.mxu0 0
      %731 = vmatpush1.bf16.msra.mxu0 0
      %732 = vmatprep.subr.bf16.mxu0 0
      %733 = vmatpush1.bf16.msra.mxu0 0
      %734 = vmatprep.subr.bf16.mxu0 0
      %735 = vmatpush1.bf16.msra.mxu0 0
      %736 = vmatprep.subr.bf16.mxu0 0
      %737 = vmatpush1.bf16.msra.mxu0 %v275
      %738 = vmatprep.subr.bf16.mxu0 0
      %739 = vmatpush2.bf16.msra.mxu0 0
      %740 = vmatprep.subr.bf16.mxu0 0
      %741 = vmatpush2.bf16.msra.mxu0 0
      %742 = vmatprep.subr.bf16.mxu0 0
      %743 = vmatpush2.bf16.msra.mxu0 0
      %744 = vmatprep.subr.bf16.mxu0 0
      %745 = vmatpush2.bf16.msra.mxu0 0
      %746 = vmatprep.subr.bf16.mxu0 0
      %747 = vmatpush2.bf16.msra.mxu0 0
      %748 = vmatprep.subr.bf16.mxu0 0
      %749 = vmatpush2.bf16.msra.mxu0 0
      %750 = vmatprep.subr.bf16.mxu0 0
      %751 = vmatpush2.bf16.msra.mxu0 0
      %752 = vmatprep.subr.bf16.mxu0 0
      %753 = vmatpush2.bf16.msra.mxu0 0
      %754 = vmatprep.mubr.bf16.mxu0 0
      %755 = vmatmul.mubr.bf16.gmra.mxu0 %v720
      %v756 = vpop.f32.mrf.mxu0
      %v757 = vadd.f32 0.0, %v756
      %v758 = vpop.f32.mrf.mxu0
      %v759 = vpop.f32.mrf.mxu0
      %v760 = vadd.f32 0.0, %v759
      %v761 = vpop.f32.mrf.mxu0
      %762 = vdwg.mxu0
      %v763 = vpack.c.bf16 %v760, %v757
      %v765 = vsel %vm288, %v763, 0
      %767 = vmatprep.subr.bf16.mxu0 0
      %768 = vmatpush1.bf16.msra.mxu0 0
      %769 = vmatprep.subr.bf16.mxu0 0
      %770 = vmatpush1.bf16.msra.mxu0 0
      %771 = vmatprep.subr.bf16.mxu0 0
      %772 = vmatpush1.bf16.msra.mxu0 0
      %773 = vmatprep.subr.bf16.mxu0 0
      %774 = vmatpush1.bf16.msra.mxu0 0
      %775 = vmatprep.subr.bf16.mxu0 0
      %776 = vmatpush1.bf16.msra.mxu0 0
      %777 = vmatprep.subr.bf16.mxu0 0
      %778 = vmatpush1.bf16.msra.mxu0 0
      %779 = vmatprep.subr.bf16.mxu0 0
      %780 = vmatpush1.bf16.msra.mxu0 0
      %781 = vmatprep.subr.bf16.mxu0 0
      %782 = vmatpush1.bf16.msra.mxu0 %v559
      %783 = vmatprep.subr.bf16.mxu0 0
      %784 = vmatpush2.bf16.msra.mxu0 0
      %785 = vmatprep.subr.bf16.mxu0 0
      %786 = vmatpush2.bf16.msra.mxu0 0
      %787 = vmatprep.subr.bf16.mxu0 0
      %788 = vmatpush2.bf16.msra.mxu0 0
      %789 = vmatprep.subr.bf16.mxu0 0
      %790 = vmatpush2.bf16.msra.mxu0 0
      %791 = vmatprep.subr.bf16.mxu0 0
      %792 = vmatpush2.bf16.msra.mxu0 0
      %793 = vmatprep.subr.bf16.mxu0 0
      %794 = vmatpush2.bf16.msra.mxu0 0
      %795 = vmatprep.subr.bf16.mxu0 0
      %796 = vmatpush2.bf16.msra.mxu0 0
      %797 = vmatprep.subr.bf16.mxu0 0
      %798 = vmatpush2.bf16.msra.mxu0 0
      %799 = vmatprep.mubr.bf16.mxu0 0
      %800 = vmatmul.mubr.bf16.gmra.mxu0 %v765
      %v801 = vpop.f32.mrf.mxu0
      %v802 = vadd.f32 0.0, %v801
      %v803 = vpop.f32.mrf.mxu0
      %v804 = vpop.f32.mrf.mxu0
      %v805 = vadd.f32 0.0, %v804
      %v806 = vpop.f32.mrf.mxu0
      %807 = vdwg.mxu0
      %v808 = vadd.f32 %v331, %v802
      %v809 = vadd.f32 %v334, %v805
      %v810 = vadd.f32 %v808, %v608
      %v811 = vadd.f32 %v809, %v608
      %v812 = vmax.f32 %v810, 0.0
      %v813 = vmax.f32 %v811, 0.0
      %v814 = vpack.c.bf16 %v813, %v812
      %v816 = vsel %vm615, %v814, 0
      %818 = vmatprep.subr.bf16.mxu0 0
      %819 = vmatpush1.bf16.msra.mxu0 0
      %820 = vmatprep.subr.bf16.mxu0 0
      %821 = vmatpush1.bf16.msra.mxu0 0
      %822 = vmatprep.subr.bf16.mxu0 0
      %823 = vmatpush1.bf16.msra.mxu0 0
      %824 = vmatprep.subr.bf16.mxu0 0
      %825 = vmatpush1.bf16.msra.mxu0 0
      %826 = vmatprep.subr.bf16.mxu0 0
      %827 = vmatpush1.bf16.msra.mxu0 0
      %828 = vmatprep.subr.bf16.mxu0 0
      %829 = vmatpush1.bf16.msra.mxu0 0
      %830 = vmatprep.subr.bf16.mxu0 0
      %831 = vmatpush1.bf16.msra.mxu0 %v285
      %832 = vmatprep.subr.bf16.mxu0 0
      %833 = vmatpush1.bf16.msra.mxu0 %v284
      %834 = vmatprep.subr.bf16.mxu0 0
      %835 = vmatpush2.bf16.msra.mxu0 0
      %836 = vmatprep.subr.bf16.mxu0 0
      %837 = vmatpush2.bf16.msra.mxu0 0
      %838 = vmatprep.subr.bf16.mxu0 0
      %839 = vmatpush2.bf16.msra.mxu0 0
      %840 = vmatprep.subr.bf16.mxu0 0
      %841 = vmatpush2.bf16.msra.mxu0 0
      %842 = vmatprep.subr.bf16.mxu0 0
      %843 = vmatpush2.bf16.msra.mxu0 0
      %844 = vmatprep.subr.bf16.mxu0 0
      %845 = vmatpush2.bf16.msra.mxu0 0
      %846 = vmatprep.subr.bf16.mxu0 0
      %847 = vmatpush2.bf16.msra.mxu0 0
      %848 = vmatprep.subr.bf16.mxu0 0
      %849 = vmatpush2.bf16.msra.mxu0 0
      %850 = vmatprep.mubr.bf16.mxu0 0
      %851 = vmatmul.mubr.bf16.gmra.mxu0 %v816
      %v852 = vpop.f32.mrf.mxu0
      %v853 = vadd.f32 0.0, %v852
      %v854 = vpop.f32.mrf.mxu0
      %v855 = vpop.f32.mrf.mxu0
      %v856 = vadd.f32 0.0, %v855
      %v857 = vpop.f32.mrf.mxu0
      %858 = vdwg.mxu0
      %v859 = vadd.f32 %v853, %v664
      %v860 = vadd.f32 %v856, %v664
      %v861 = vmax.f32 %v859, 0.0
      %v862 = vmax.f32 %v860, 0.0
      %v863 = vmax.f32 %v668, %v861
      %v864 = vmax.f32 %v669, %v862
      %v865 = vsel %vm460, %v712, inf
      %866 = vmin.xlane.f32.xlu0 %v865
      %v867 = vpop.xlane.xlu0 %866
      %v868 = vsel %vm460, %v713, inf
      %869 = vmin.xlane.f32.xlu0 %v868
      %v870 = vpop.xlane.xlu0 %869
      %vm871 = vcmp.le.f32.partialorder %v712, %v867
      %vm872 = vcmp.le.f32.partialorder %v713, %v870
      %v873 = vsel %vm871, %v429, 16
      %v874 = vsel %vm872, %v429, 16
      %v875 = vsel %vm460, %v873, 2147483647
      %v876 = vand.u32 %v875, 65535
      %v877 = vshra.s32 %v875, 16
      %v878 = vcvt.s32.f32 %v876
      %v879 = vcvt.s32.f32 %v877
      %880 = vmin.xlane.f32.xlu0 %v879
      %v881 = vpop.xlane.xlu0 %880
      %vm882 = vcmp.eq.f32.partialorder %v879, %v881
      %v883 = vsel %vm882, %v878, inf
      %884 = vmin.xlane.f32.xlu0 %v883
      %v885 = vpop.xlane.xlu0 %884
      %v886 = vcvt.f32.s32 %v885
      %v887 = vcvt.f32.s32 %v881
      %v888 = vshll.u32 %v887, 16
      %v889 = vadd.s32 %v888, %v886
      %v890 = vsel %vm460, %v874, 2147483647
      %v891 = vand.u32 %v890, 65535
      %v892 = vshra.s32 %v890, 16
      %v893 = vcvt.s32.f32 %v891
      %v894 = vcvt.s32.f32 %v892
      %895 = vmin.xlane.f32.xlu0 %v894
      %v896 = vpop.xlane.xlu0 %895
      %vm897 = vcmp.eq.f32.partialorder %v894, %v896
      %v898 = vsel %vm897, %v893, inf
      %899 = vmin.xlane.f32.xlu0 %v898
      %v900 = vpop.xlane.xlu0 %899
      %v901 = vcvt.f32.s32 %v900
      %v902 = vcvt.f32.s32 %v896
      %v903 = vshll.u32 %v902, 16
      %v904 = vadd.s32 %v903, %v901
      %vm905 = vcmp.eq.s32.totalorder %v429, %v889
      %vm906 = vcmp.eq.s32.totalorder %v429, %v904
      %v907 = vsel %vm905, inf, %v712
      %v908 = vsel %vm906, inf, %v713
      %v909 = vsel %vm905, 1, 0
      %v910 = vsel %vm906, 1, 0
      %v911 = vcvt.s32.f32 %v909
      %v912 = vcvt.s32.f32 %v910
      %v913 = vpack.c.bf16 %v912, %v911
      %v915 = vsel %vm460, %v913, 0
      %917 = vmatprep.subr.bf16.mxu0 0
      %918 = vmatpush1.bf16.msra.mxu0 0
      %919 = vmatprep.subr.bf16.mxu0 0
      %920 = vmatpush1.bf16.msra.mxu0 0
      %921 = vmatprep.subr.bf16.mxu0 0
      %922 = vmatpush1.bf16.msra.mxu0 0
      %923 = vmatprep.subr.bf16.mxu0 0
      %924 = vmatpush1.bf16.msra.mxu0 0
      %925 = vmatprep.subr.bf16.mxu0 0
      %926 = vmatpush1.bf16.msra.mxu0 0
      %927 = vmatprep.subr.bf16.mxu0 0
      %928 = vmatpush1.bf16.msra.mxu0 0
      %929 = vmatprep.subr.bf16.mxu0 0
      %930 = vmatpush1.bf16.msra.mxu0 0
      %931 = vmatprep.subr.bf16.mxu0 0
      %932 = vmatpush1.bf16.msra.mxu0 %v275
      %933 = vmatprep.subr.bf16.mxu0 0
      %934 = vmatpush2.bf16.msra.mxu0 0
      %935 = vmatprep.subr.bf16.mxu0 0
      %936 = vmatpush2.bf16.msra.mxu0 0
      %937 = vmatprep.subr.bf16.mxu0 0
      %938 = vmatpush2.bf16.msra.mxu0 0
      %939 = vmatprep.subr.bf16.mxu0 0
      %940 = vmatpush2.bf16.msra.mxu0 0
      %941 = vmatprep.subr.bf16.mxu0 0
      %942 = vmatpush2.bf16.msra.mxu0 0
      %943 = vmatprep.subr.bf16.mxu0 0
      %944 = vmatpush2.bf16.msra.mxu0 0
      %945 = vmatprep.subr.bf16.mxu0 0
      %946 = vmatpush2.bf16.msra.mxu0 0
      %947 = vmatprep.subr.bf16.mxu0 0
      %948 = vmatpush2.bf16.msra.mxu0 0
      %949 = vmatprep.mubr.bf16.mxu0 0
      %950 = vmatmul.mubr.bf16.gmra.mxu0 %v915
      %v951 = vpop.f32.mrf.mxu0
      %v952 = vadd.f32 0.0, %v951
      %v953 = vpop.f32.mrf.mxu0
      %v954 = vpop.f32.mrf.mxu0
      %v955 = vadd.f32 0.0, %v954
      %v956 = vpop.f32.mrf.mxu0
      %957 = vdwg.mxu0
      %v958 = vpack.c.bf16 %v955, %v952
      %v960 = vsel %vm288, %v958, 0
      %962 = vmatprep.subr.bf16.mxu0 0
      %963 = vmatpush1.bf16.msra.mxu0 0
      %964 = vmatprep.subr.bf16.mxu0 0
      %965 = vmatpush1.bf16.msra.mxu0 0
      %966 = vmatprep.subr.bf16.mxu0 0
      %967 = vmatpush1.bf16.msra.mxu0 0
      %968 = vmatprep.subr.bf16.mxu0 0
      %969 = vmatpush1.bf16.msra.mxu0 0
      %970 = vmatprep.subr.bf16.mxu0 0
      %971 = vmatpush1.bf16.msra.mxu0 0
      %972 = vmatprep.subr.bf16.mxu0 0
      %973 = vmatpush1.bf16.msra.mxu0 0
      %974 = vmatprep.subr.bf16.mxu0 0
      %975 = vmatpush1.bf16.msra.mxu0 0
      %976 = vmatprep.subr.bf16.mxu0 0
      %977 = vmatpush1.bf16.msra.mxu0 %v559
      %978 = vmatprep.subr.bf16.mxu0 0
      %979 = vmatpush2.bf16.msra.mxu0 0
      %980 = vmatprep.subr.bf16.mxu0 0
      %981 = vmatpush2.bf16.msra.mxu0 0
      %982 = vmatprep.subr.bf16.mxu0 0
      %983 = vmatpush2.bf16.msra.mxu0 0
      %984 = vmatprep.subr.bf16.mxu0 0
      %985 = vmatpush2.bf16.msra.mxu0 0
      %986 = vmatprep.subr.bf16.mxu0 0
      %987 = vmatpush2.bf16.msra.mxu0 0
      %988 = vmatprep.subr.bf16.mxu0 0
      %989 = vmatpush2.bf16.msra.mxu0 0
      %990 = vmatprep.subr.bf16.mxu0 0
      %991 = vmatpush2.bf16.msra.mxu0 0
      %992 = vmatprep.subr.bf16.mxu0 0
      %993 = vmatpush2.bf16.msra.mxu0 0
      %994 = vmatprep.mubr.bf16.mxu0 0
      %995 = vmatmul.mubr.bf16.gmra.mxu0 %v960
      %v996 = vpop.f32.mrf.mxu0
      %v997 = vadd.f32 0.0, %v996
      %v998 = vpop.f32.mrf.mxu0
      %v999 = vpop.f32.mrf.mxu0
      %v1000 = vadd.f32 0.0, %v999
      %v1001 = vpop.f32.mrf.mxu0
      %1002 = vdwg.mxu0
      %v1003 = vadd.f32 %v331, %v997
      %v1004 = vadd.f32 %v334, %v1000
      %v1005 = vadd.f32 %v1003, %v608
      %v1006 = vadd.f32 %v1004, %v608
      %v1007 = vmax.f32 %v1005, 0.0
      %v1008 = vmax.f32 %v1006, 0.0
      %v1009 = vpack.c.bf16 %v1008, %v1007
      %v1011 = vsel %vm615, %v1009, 0
      %1013 = vmatprep.subr.bf16.mxu0 0
      %1014 = vmatpush1.bf16.msra.mxu0 0
      %1015 = vmatprep.subr.bf16.mxu0 0
      %1016 = vmatpush1.bf16.msra.mxu0 0
      %1017 = vmatprep.subr.bf16.mxu0 0
      %1018 = vmatpush1.bf16.msra.mxu0 0
      %1019 = vmatprep.subr.bf16.mxu0 0
      %1020 = vmatpush1.bf16.msra.mxu0 0
      %1021 = vmatprep.subr.bf16.mxu0 0
      %1022 = vmatpush1.bf16.msra.mxu0 0
      %1023 = vmatprep.subr.bf16.mxu0 0
      %1024 = vmatpush1.bf16.msra.mxu0 0
      %1025 = vmatprep.subr.bf16.mxu0 0
      %1026 = vmatpush1.bf16.msra.mxu0 %v285
      %1027 = vmatprep.subr.bf16.mxu0 0
      %1028 = vmatpush1.bf16.msra.mxu0 %v284
      %1029 = vmatprep.subr.bf16.mxu0 0
      %1030 = vmatpush2.bf16.msra.mxu0 0
      %1031 = vmatprep.subr.bf16.mxu0 0
      %1032 = vmatpush2.bf16.msra.mxu0 0
      %1033 = vmatprep.subr.bf16.mxu0 0
      %1034 = vmatpush2.bf16.msra.mxu0 0
      %1035 = vmatprep.subr.bf16.mxu0 0
      %1036 = vmatpush2.bf16.msra.mxu0 0
      %1037 = vmatprep.subr.bf16.mxu0 0
      %1038 = vmatpush2.bf16.msra.mxu0 0
      %1039 = vmatprep.subr.bf16.mxu0 0
      %1040 = vmatpush2.bf16.msra.mxu0 0
      %1041 = vmatprep.subr.bf16.mxu0 0
      %1042 = vmatpush2.bf16.msra.mxu0 0
      %1043 = vmatprep.subr.bf16.mxu0 0
      %1044 = vmatpush2.bf16.msra.mxu0 0
      %1045 = vmatprep.mubr.bf16.mxu0 0
      %1046 = vmatmul.mubr.bf16.gmra.mxu0 %v1011
      %v1047 = vpop.f32.mrf.mxu0
      %v1048 = vadd.f32 0.0, %v1047
      %v1049 = vpop.f32.mrf.mxu0
      %v1050 = vpop.f32.mrf.mxu0
      %v1051 = vadd.f32 0.0, %v1050
      %v1052 = vpop.f32.mrf.mxu0
      %1053 = vdwg.mxu0
      %v1054 = vadd.f32 %v1048, %v664
      %v1055 = vadd.f32 %v1051, %v664
      %v1056 = vmax.f32 %v1054, 0.0
      %v1057 = vmax.f32 %v1055, 0.0
      %v1058 = vmax.f32 %v863, %v1056
      %v1059 = vmax.f32 %v864, %v1057
      %v1060 = vsel %vm460, %v907, inf
      %1061 = vmin.xlane.f32.xlu0 %v1060
      %v1062 = vpop.xlane.xlu0 %1061
      %v1063 = vsel %vm460, %v908, inf
      %1064 = vmin.xlane.f32.xlu0 %v1063
      %v1065 = vpop.xlane.xlu0 %1064
      %vm1066 = vcmp.le.f32.partialorder %v907, %v1062
      %vm1067 = vcmp.le.f32.partialorder %v908, %v1065
      %v1068 = vsel %vm1066, %v429, 16
      %v1069 = vsel %vm1067, %v429, 16
      %v1070 = vsel %vm460, %v1068, 2147483647
      %v1071 = vand.u32 %v1070, 65535
      %v1072 = vshra.s32 %v1070, 16
      %v1073 = vcvt.s32.f32 %v1071
      %v1074 = vcvt.s32.f32 %v1072
      %1075 = vmin.xlane.f32.xlu0 %v1074
      %v1076 = vpop.xlane.xlu0 %1075
      %vm1077 = vcmp.eq.f32.partialorder %v1074, %v1076
      %v1078 = vsel %vm1077, %v1073, inf
      %1079 = vmin.xlane.f32.xlu0 %v1078
      %v1080 = vpop.xlane.xlu0 %1079
      %v1081 = vcvt.f32.s32 %v1080
      %v1082 = vcvt.f32.s32 %v1076
      %v1083 = vshll.u32 %v1082, 16
      %v1084 = vadd.s32 %v1083, %v1081
      %v1085 = vsel %vm460, %v1069, 2147483647
      %v1086 = vand.u32 %v1085, 65535
      %v1087 = vshra.s32 %v1085, 16
      %v1088 = vcvt.s32.f32 %v1086
      %v1089 = vcvt.s32.f32 %v1087
      %1090 = vmin.xlane.f32.xlu0 %v1089
      %v1091 = vpop.xlane.xlu0 %1090
      %vm1092 = vcmp.eq.f32.partialorder %v1089, %v1091
      %v1093 = vsel %vm1092, %v1088, inf
      %1094 = vmin.xlane.f32.xlu0 %v1093
      %v1095 = vpop.xlane.xlu0 %1094
      %v1096 = vcvt.f32.s32 %v1095
      %v1097 = vcvt.f32.s32 %v1091
      %v1098 = vshll.u32 %v1097, 16
      %v1099 = vadd.s32 %v1098, %v1096
      %vm1100 = vcmp.eq.s32.totalorder %v429, %v1084
      %vm1101 = vcmp.eq.s32.totalorder %v429, %v1099
      %v1102 = vsel %vm1100, 1, 0
      %v1103 = vsel %vm1101, 1, 0
      %v1104 = vcvt.s32.f32 %v1102
      %v1105 = vcvt.s32.f32 %v1103
      %v1106 = vpack.c.bf16 %v1105, %v1104
      %v1108 = vsel %vm460, %v1106, 0
      %1110 = vmatprep.subr.bf16.mxu0 0
      %1111 = vmatpush1.bf16.msra.mxu0 0
      %1112 = vmatprep.subr.bf16.mxu0 0
      %1113 = vmatpush1.bf16.msra.mxu0 0
      %1114 = vmatprep.subr.bf16.mxu0 0
      %1115 = vmatpush1.bf16.msra.mxu0 0
      %1116 = vmatprep.subr.bf16.mxu0 0
      %1117 = vmatpush1.bf16.msra.mxu0 0
      %1118 = vmatprep.subr.bf16.mxu0 0
      %1119 = vmatpush1.bf16.msra.mxu0 0
      %1120 = vmatprep.subr.bf16.mxu0 0
      %1121 = vmatpush1.bf16.msra.mxu0 0
      %1122 = vmatprep.subr.bf16.mxu0 0
      %1123 = vmatpush1.bf16.msra.mxu0 0
      %1124 = vmatprep.subr.bf16.mxu0 0
      %1125 = vmatpush1.bf16.msra.mxu0 %v275
      %1126 = vmatprep.subr.bf16.mxu0 0
      %1127 = vmatpush2.bf16.msra.mxu0 0
      %1128 = vmatprep.subr.bf16.mxu0 0
      %1129 = vmatpush2.bf16.msra.mxu0 0
      %1130 = vmatprep.subr.bf16.mxu0 0
      %1131 = vmatpush2.bf16.msra.mxu0 0
      %1132 = vmatprep.subr.bf16.mxu0 0
      %1133 = vmatpush2.bf16.msra.mxu0 0
      %1134 = vmatprep.subr.bf16.mxu0 0
      %1135 = vmatpush2.bf16.msra.mxu0 0
      %1136 = vmatprep.subr.bf16.mxu0 0
      %1137 = vmatpush2.bf16.msra.mxu0 0
      %1138 = vmatprep.subr.bf16.mxu0 0
      %1139 = vmatpush2.bf16.msra.mxu0 0
      %1140 = vmatprep.subr.bf16.mxu0 0
      %1141 = vmatpush2.bf16.msra.mxu0 0
      %1142 = vmatprep.mubr.bf16.mxu0 0
      %1143 = vmatmul.mubr.bf16.gmra.mxu0 %v1108
      %v1144 = vpop.f32.mrf.mxu0
      %v1145 = vadd.f32 0.0, %v1144
      %v1146 = vpop.f32.mrf.mxu0
      %v1147 = vpop.f32.mrf.mxu0
      %v1148 = vadd.f32 0.0, %v1147
      %v1149 = vpop.f32.mrf.mxu0
      %1150 = vdwg.mxu0
      %v1151 = vpack.c.bf16 %v1148, %v1145
      %v1153 = vsel %vm288, %v1151, 0
      %1155 = vmatprep.subr.bf16.mxu0 0
      %1156 = vmatpush1.bf16.msra.mxu0 0
      %1157 = vmatprep.subr.bf16.mxu0 0
      %1158 = vmatpush1.bf16.msra.mxu0 0
      %1159 = vmatprep.subr.bf16.mxu0 0
      %1160 = vmatpush1.bf16.msra.mxu0 0
      %1161 = vmatprep.subr.bf16.mxu0 0
      %1162 = vmatpush1.bf16.msra.mxu0 0
      %1163 = vmatprep.subr.bf16.mxu0 0
      %1164 = vmatpush1.bf16.msra.mxu0 0
      %1165 = vmatprep.subr.bf16.mxu0 0
      %1166 = vmatpush1.bf16.msra.mxu0 0
      %1167 = vmatprep.subr.bf16.mxu0 0
      %1168 = vmatpush1.bf16.msra.mxu0 0
      %1169 = vmatprep.subr.bf16.mxu0 0
      %1170 = vmatpush1.bf16.msra.mxu0 %v559
      %1171 = vmatprep.subr.bf16.mxu0 0
      %1172 = vmatpush2.bf16.msra.mxu0 0
      %1173 = vmatprep.subr.bf16.mxu0 0
      %1174 = vmatpush2.bf16.msra.mxu0 0
      %1175 = vmatprep.subr.bf16.mxu0 0
      %1176 = vmatpush2.bf16.msra.mxu0 0
      %1177 = vmatprep.subr.bf16.mxu0 0
      %1178 = vmatpush2.bf16.msra.mxu0 0
      %1179 = vmatprep.subr.bf16.mxu0 0
      %1180 = vmatpush2.bf16.msra.mxu0 0
      %1181 = vmatprep.subr.bf16.mxu0 0
      %1182 = vmatpush2.bf16.msra.mxu0 0
      %1183 = vmatprep.subr.bf16.mxu0 0
      %1184 = vmatpush2.bf16.msra.mxu0 0
      %1185 = vmatprep.subr.bf16.mxu0 0
      %1186 = vmatpush2.bf16.msra.mxu0 0
      %1187 = vmatprep.mubr.bf16.mxu0 0
      %1188 = vmatmul.mubr.bf16.gmra.mxu0 %v1153
      %v1189 = vpop.f32.mrf.mxu0
      %v1190 = vadd.f32 0.0, %v1189
      %v1191 = vpop.f32.mrf.mxu0
      %v1192 = vpop.f32.mrf.mxu0
      %v1193 = vadd.f32 0.0, %v1192
      %v1194 = vpop.f32.mrf.mxu0
      %1195 = vdwg.mxu0
      %v1196 = vadd.f32 %v331, %v1190
      %v1197 = vadd.f32 %v334, %v1193
      %v1198 = vadd.f32 %v1196, %v608
      %v1199 = vadd.f32 %v1197, %v608
      %v1200 = vmax.f32 %v1198, 0.0
      %v1201 = vmax.f32 %v1199, 0.0
      %v1202 = vpack.c.bf16 %v1201, %v1200
      %v1204 = vsel %vm615, %v1202, 0
      %1206 = vmatprep.subr.bf16.mxu0 0
      %1207 = vmatpush1.bf16.msra.mxu0 0
      %1208 = vmatprep.subr.bf16.mxu0 0
      %1209 = vmatpush1.bf16.msra.mxu0 0
      %1210 = vmatprep.subr.bf16.mxu0 0
      %1211 = vmatpush1.bf16.msra.mxu0 0
      %1212 = vmatprep.subr.bf16.mxu0 0
      %1213 = vmatpush1.bf16.msra.mxu0 0
      %1214 = vmatprep.subr.bf16.mxu0 0
      %1215 = vmatpush1.bf16.msra.mxu0 0
      %1216 = vmatprep.subr.bf16.mxu0 0
      %1217 = vmatpush1.bf16.msra.mxu0 0
      %1218 = vmatprep.subr.bf16.mxu0 0
      %1219 = vmatpush1.bf16.msra.mxu0 %v285
      %1220 = vmatprep.subr.bf16.mxu0 0
      %1221 = vmatpush1.bf16.msra.mxu0 %v284
      %1222 = vmatprep.subr.bf16.mxu0 0
      %1223 = vmatpush2.bf16.msra.mxu0 0
      %1224 = vmatprep.subr.bf16.mxu0 0
      %1225 = vmatpush2.bf16.msra.mxu0 0
      %1226 = vmatprep.subr.bf16.mxu0 0
      %1227 = vmatpush2.bf16.msra.mxu0 0
      %1228 = vmatprep.subr.bf16.mxu0 0
      %1229 = vmatpush2.bf16.msra.mxu0 0
      %1230 = vmatprep.subr.bf16.mxu0 0
      %1231 = vmatpush2.bf16.msra.mxu0 0
      %1232 = vmatprep.subr.bf16.mxu0 0
      %1233 = vmatpush2.bf16.msra.mxu0 0
      %1234 = vmatprep.subr.bf16.mxu0 0
      %1235 = vmatpush2.bf16.msra.mxu0 0
      %1236 = vmatprep.subr.bf16.mxu0 0
      %1237 = vmatpush2.bf16.msra.mxu0 0
      %1238 = vmatprep.mubr.bf16.mxu0 0
      %1239 = vmatmul.mubr.bf16.gmra.mxu0 %v1204
      %v1240 = vpop.f32.mrf.mxu0
      %v1241 = vadd.f32 0.0, %v1240
      %v1242 = vpop.f32.mrf.mxu0
      %v1243 = vpop.f32.mrf.mxu0
      %v1244 = vadd.f32 0.0, %v1243
      %v1245 = vpop.f32.mrf.mxu0
      %1246 = vdwg.mxu0
      %v1247 = vadd.f32 %v1241, %v664
      %v1248 = vadd.f32 %v1244, %v664
      %v1249 = vmax.f32 %v1247, 0.0
      %v1250 = vmax.f32 %v1248, 0.0
      %v1251 = vmax.f32 %v1058, %v1249
      %v1252 = vmax.f32 %v1059, %v1250
      %1253 = vxpose.xlu0.b32.start [1/16] %v1251, 128
      %1254 = vxpose.xlu0.b32.cont [2/16] %v1252, 128
      %1255 = vxpose.xlu0.b32.cont [3/16] 0.0, 128
      %1256 = vxpose.xlu0.b32.cont [4/16] 0.0, 128
      %1257 = vxpose.xlu0.b32.cont [5/16] 0.0, 128
      %1258 = vxpose.xlu0.b32.cont [6/16] 0.0, 128
      %1259 = vxpose.xlu0.b32.cont [7/16] 0.0, 128
      %1260 = vxpose.xlu0.b32.cont [8/16] 0.0, 128
      %1261 = vxpose.xlu0.b32.cont [9/16] 0.0, 128
      %1262 = vxpose.xlu0.b32.cont [10/16] 0.0, 128
      %1263 = vxpose.xlu0.b32.cont [11/16] 0.0, 128
      %1264 = vxpose.xlu0.b32.cont [12/16] 0.0, 128
      %1265 = vxpose.xlu0.b32.cont [13/16] 0.0, 128
      %1266 = vxpose.xlu0.b32.cont [14/16] 0.0, 128
      %1267 = vxpose.xlu0.b32.cont [15/16] 0.0, 128
      %1268 = vxpose.xlu0.b32.end [16/16] 0.0, 128
      %v1269 = vpop.trf.xlu0
      %v1270 = vpop.trf.xlu0
      %v1271 = vpop.trf.xlu0
      %v1272 = vpop.trf.xlu0
      %v1273 = vpop.trf.xlu0
      %v1274 = vpop.trf.xlu0
      %v1275 = vpop.trf.xlu0
      %v1276 = vpop.trf.xlu0
      %v1277 = vpop.trf.xlu0
      %v1278 = vpop.trf.xlu0
      %v1279 = vpop.trf.xlu0
      %v1280 = vpop.trf.xlu0
      %v1281 = vpop.trf.xlu0
      %v1282 = vpop.trf.xlu0
      %v1283 = vpop.trf.xlu0
      %v1284 = vpop.trf.xlu0
      %1285 = vst.msk [vmem:[%s271] sm:$0xff] %vm460, %v1269
      %1286 = vst.msk [vmem:[%s271 + $0x8] sm:$0xff] %vm460, %v1270
      %1287 = vst.msk [vmem:[%s271 + $0x10] sm:$0xff] %vm460, %v1271
      %1288 = vst.msk [vmem:[%s271 + $0x18] sm:$0xff] %vm460, %v1272
      %p1289 = scmp.lt.s32.totalorder %s21, 1
      %s1290 = scalar_select %p1289, %s21, 1
      %p1291 = scmp.lt.s32.totalorder %s22, 0
      %s1292 = scalar_select %p1291, %s22, 0
      %s1293 = smul.addr %s1290, 4
      %s1294 = sadd.s32 %s1292, %s1293
      %s1295 = smul.addr %s1294, 8
      %s1296 = scalar_lea.vmem %s6, %s1295
      // Predicated region
      $region45: #{tpu_custom_call.1} parent=43 // pred_check
        %p1297 = pneg %p180
      $region46: #{tpu_custom_call.1} parent=43 // pred_check_branch
        %1299 = sbr.rel (%p1297) target = $region48
      $region47: #{tpu_custom_call.1} parent=43 // pred_region
        _
      $region48: #{tpu_custom_call.1} parent=43 // pred_fallthru
        _
    $region44: #{tpu_custom_call.1} parent=5 // pred_fallthru
      _
    %p1300 = scmp.le.s32.totalorder 2, %s12
    // Predicated region
    $region49: #{tpu_custom_call.1} parent=5 // pred_check
      %p1301 = pneg %p1300
    $region50: #{tpu_custom_call.1} parent=5 // pred_check_branch
      %1303 = sbr.rel (%p1301) target = $region52
    $region51: #{tpu_custom_call.1} parent=5 // pred_region
      %s1304 = ssub.s32 %s12, 2
      // Predicated region
      $region53: #{tpu_custom_call.1} parent=51 // pred_check
        %p1305 = pneg %p186
      $region54: #{tpu_custom_call.1} parent=51 // pred_check_branch
        %1307 = sbr.rel (%p1305) target = $region56
      $region55: #{tpu_custom_call.1} parent=51 // pred_region
        %p1308 = scmp.lt.s32.totalorder %s23, 1
        %s1309 = scalar_select %p1308, %s23, 1
        %p1310 = scmp.lt.s32.totalorder %s24, 0
        %s1311 = scalar_select %p1310, %s24, 0
        %s1312 = smul.addr %s1309, 4
        %s1313 = sadd.s32 %s1311, %s1312
        %s1314 = smul.addr %s1313, 8
        %s1315 = scalar_lea.vmem %s6, %s1314
      $region56: #{tpu_custom_call.1} parent=51 // pred_fallthru
        _
    $region52: #{tpu_custom_call.1} parent=5 // pred_fallthru
      _
  $region6: #{tpu_custom_call.1} parent=0 // loop_footer
    %s16 = sadd.s32 1, %s12
  $region7: #{tpu_custom_call.1} parent=0 // loop_footer_branch
    %11 = sbr.rel target = $region3
  $region8: #{tpu_custom_call.1} parent=0 // loop_exit
    _

</llo_original>
